<compile_context>
chip_gen: v5e
topology: v5e:2x2
jax: 0.10.0
libtpu: 0.0.40
codegen_flags: <defaults>
</compile_context>

<pallas_src>
import functools

import jax
import jax.numpy as jnp
import numpy as np
from jax.experimental import pallas as pl
from jax.experimental.pallas import tpu as pltpu


NJOINTS = 21
NFEATS = 3
C_MOTION = NJOINTS * NFEATS            # 63 motion channels
DEC_HIDDEN = 64                        # channels of the two AdaIN decoder layers
NUM_ADAIN_PARAMS = 4 * DEC_HIDDEN      # get_num_adain_params(style_decoder)
STYLE_DIM = 16
MLP_HIDDEN = 32

# --- packed parameter slab layout (all row offsets are multiples of 8) --------
ROW_DW1 = 0                            # dec_w1 (64, 63)
ROW_DW2 = 64                           # dec_w2 (64, 64)
ROW_DW3 = 128                          # dec_w3 (63, 64)
ROW_MW1 = 192                          # mlp_w1 (32, 16)
ROW_MW2 = 224                          # mlp_w2 (32, 32)
ROW_MW3 = 256                          # mlp_w3 (256, 32)
WSLAB_ROWS = 512                       # (512, 128) f32 = 256 KiB

BROW_M1 = 0                            # mlp_b1 (32,)
BROW_M2 = 32                           # mlp_b2 (32,)
BROW_M3 = 64                           # mlp_b3 (256,)
BROW_D3 = 320                          # dec_b3 (63,)
BSLAB_ROWS = 384                       # (384, 1) f32


def _full2d(shape):
    """Full-array 2-D block (single grid step)."""
    return pl.BlockSpec(shape, lambda i: (0, 0))


# ---------------------------------------------------------------------------
# Fused decode kernel: MLP -> AdaIN layer 1 -> AdaIN layer 2 -> final 1x1 conv
# ---------------------------------------------------------------------------
def _decode_fused_kernel(x_ref, code_ref, sa_ref, sb_ref, w_ref, b_ref, o_ref):
    f32 = jnp.float32
    C = DEC_HIDDEN

    seg_avg = sa_ref[...]              # (BTp, B)  per-sample time-mean matrix
    seg_bc = sb_ref[...]               # (B, BTp)  per-sample broadcast matrix

    # ---- MLP: style code -> AdaIN params, batch kept on the lane axis ----
    h = (jnp.dot(w_ref[ROW_MW1:ROW_MW1 + MLP_HIDDEN, 0:STYLE_DIM], code_ref[...],
                 preferred_element_type=f32)
         + b_ref[BROW_M1:BROW_M1 + MLP_HIDDEN, :])
    h = jnp.maximum(h, 0.0)
    h = (jnp.dot(w_ref[ROW_MW2:ROW_MW2 + MLP_HIDDEN, 0:MLP_HIDDEN], h,
                 preferred_element_type=f32)
         + b_ref[BROW_M2:BROW_M2 + MLP_HIDDEN, :])
    h = jnp.maximum(h, 0.0)
    ap = (jnp.dot(w_ref[ROW_MW3:ROW_MW3 + NUM_ADAIN_PARAMS, 0:MLP_HIDDEN], h,
                  preferred_element_type=f32)
          + b_ref[BROW_M3:BROW_M3 + NUM_ADAIN_PARAMS, :])        # (4C, B)

    # assign_adain_params ordering: [mean_1 | std_1 | mean_2 | std_2]
    ab1 = ap[0 * C:1 * C, :]           # (C, B) AdaIN bias   (layer 1)
    aw1 = ap[1 * C:2 * C, :]           # (C, B) AdaIN weight (layer 1)
    ab2 = ap[2 * C:3 * C, :]
    aw2 = ap[3 * C:4 * C, :]

    def adain_layer(xin, w, aw, ab):
        # 1x1 conv == channel matmul; conv bias dropped (instance-norm mean
        # subtraction cancels it exactly).
        hh = jnp.dot(w, xin, preferred_element_type=f32)                    # (C, BTp)
        # One matmul for both statistics: [h ; h*h] @ seg_avg -> [mean ; E[h^2]]
        stats = jnp.dot(jnp.concatenate([hh, hh * hh], axis=0), seg_avg,
                        preferred_element_type=f32)                         # (2C, B)
        mean_cb = stats[0:C, :]
        var_cb = stats[C:2 * C, :] - mean_cb * mean_cb                      # E[h^2]-m^2
        # Folded AdaIN affine: y = scale*h + shift (stats stay in f32).
        scale_cb = aw * jax.lax.rsqrt(var_cb + 1e-5)                        # (C, B)
        shift_cb = ab - scale_cb * mean_cb                                  # (C, B)
        # One matmul for both broadcasts back to the lane axis.
        ssb = jnp.dot(jnp.concatenate([scale_cb, shift_cb], axis=0), seg_bc,
                      preferred_element_type=f32)                           # (2C, BTp)
        y = ssb[0:C, :] * hh + ssb[C:2 * C, :]
        return jnp.where(y > 0, y, 0.2 * y)                                 # LeakyReLU(0.2)

    h1 = adain_layer(x_ref[...], w_ref[ROW_DW1:ROW_DW1 + C, 0:C_MOTION], aw1, ab1)
    h2 = adain_layer(h1, w_ref[ROW_DW2:ROW_DW2 + C, 0:C], aw2, ab2)
    o_ref[...] = (jnp.dot(w_ref[ROW_DW3:ROW_DW3 + C_MOTION, 0:C], h2,
                          preferred_element_type=f32)
                  + b_ref[BROW_D3:BROW_D3 + C_MOTION, :])                    # (63, BTp)


# ---------------------------------------------------------------------------
# Model glue: parameters, packing, style encoder, decode()
# ---------------------------------------------------------------------------
def init_params(key):
    ks = jax.random.split(key, 8)
    s = 0.1
    p = {
        # MLP: style code -> adain params (stored pre-transposed: (out, in))
        "mlp_w1t": s * jax.random.normal(ks[0], (MLP_HIDDEN, STYLE_DIM), jnp.float32),
        "mlp_b1": jnp.zeros((MLP_HIDDEN, 1), jnp.float32),
        "mlp_w2t": s * jax.random.normal(ks[1], (MLP_HIDDEN, MLP_HIDDEN), jnp.float32),
        "mlp_b2": jnp.zeros((MLP_HIDDEN, 1), jnp.float32),
        "mlp_w3t": s * jax.random.normal(ks[2], (NUM_ADAIN_PARAMS, MLP_HIDDEN), jnp.float32),
        "mlp_b3": jnp.ones((NUM_ADAIN_PARAMS, 1), jnp.float32),
        # style decoder: two 1x1 conv + AdaIN layers (conv biases dropped:
        # cancelled by instance norm), final 1x1 conv to 63 channels
        "dec_w1": s * jax.random.normal(ks[3], (DEC_HIDDEN, C_MOTION), jnp.float32),
        "dec_w2": s * jax.random.normal(ks[4], (DEC_HIDDEN, DEC_HIDDEN), jnp.float32),
        "dec_w3": s * jax.random.normal(ks[5], (C_MOTION, DEC_HIDDEN), jnp.float32),
        "dec_b3": jnp.zeros((C_MOTION, 1), jnp.float32),
        # stand-in style encoder (real EncoderStyle is undefined upstream)
        "enc_w": s * jax.random.normal(ks[6], (C_MOTION, STYLE_DIM), jnp.float32),
        "enc_b": jnp.zeros((STYLE_DIM,), jnp.float32),
    }
    return pack_params(p)


def pack_params(p):
    """Pack weights/biases into two pre-padded slabs (2 DMAs instead of 10)."""
    w = jnp.zeros((WSLAB_ROWS, 128), jnp.float32)
    w = w.at[ROW_DW1:ROW_DW1 + DEC_HIDDEN, 0:C_MOTION].set(p["dec_w1"])
    w = w.at[ROW_DW2:ROW_DW2 + DEC_HIDDEN, 0:DEC_HIDDEN].set(p["dec_w2"])
    w = w.at[ROW_DW3:ROW_DW3 + C_MOTION, 0:DEC_HIDDEN].set(p["dec_w3"])
    w = w.at[ROW_MW1:ROW_MW1 + MLP_HIDDEN, 0:STYLE_DIM].set(p["mlp_w1t"])
    w = w.at[ROW_MW2:ROW_MW2 + MLP_HIDDEN, 0:MLP_HIDDEN].set(p["mlp_w2t"])
    w = w.at[ROW_MW3:ROW_MW3 + NUM_ADAIN_PARAMS, 0:MLP_HIDDEN].set(p["mlp_w3t"])
    b = jnp.zeros((BSLAB_ROWS, 1), jnp.float32)
    b = b.at[BROW_M1:BROW_M1 + MLP_HIDDEN].set(p["mlp_b1"])
    b = b.at[BROW_M2:BROW_M2 + MLP_HIDDEN].set(p["mlp_b2"])
    b = b.at[BROW_M3:BROW_M3 + NUM_ADAIN_PARAMS].set(p["mlp_b3"])
    b = b.at[BROW_D3:BROW_D3 + C_MOTION].set(p["dec_b3"])
    return dict(p, wslab=w, bslab=b)


def style_encoder(x, p):
    # x: (B, 21, 3, T) -> style code (B, STYLE_DIM).  Plain XLA: a separate
    # pallas_call launch would cost more than this 63x16 matmul.
    B, J, F, T = x.shape
    feat = jnp.mean(x.reshape(B, J * F, T), axis=-1)               # (B, 63)
    return feat @ p["enc_w"] + p["enc_b"]


@functools.partial(jax.jit, static_argnames=("num_frames",))
def decode(content, model_code, p, *, num_frames):
    """Mirrors Model.decode: content (B, 21, 3, T) -> (B, 21, 3, num_frames)."""
    B = content.shape[0]
    T = content.shape[3]
    if num_frames != T:
        raise ValueError(f"num_frames ({num_frames}) must equal content frames ({T})")
    BT = B * T
    BT_pad = max(128, ((BT + 127) // 128) * 128)   # lane-dense activation slab

    # PyTorch: content.transpose(1, 2).reshape(B, 63, T); then fold (B, T)
    # onto the lane axis -> (63, B*T) with lane index b*T + t, zero-padded to BT_pad.
    x2d = jnp.transpose(content, (2, 1, 0, 3)).reshape(C_MOTION, BT)
    x2d = jnp.pad(x2d, ((0, 0), (0, BT_pad - BT)))
    code_t = jnp.transpose(model_code)                              # (STYLE_DIM, B)

    # Segment matrices built on the host (B, T static): per-sample mean over time
    # is one (C,BTp)x(BTp,B) matmul, broadcast back is one (C,B)x(B,BTp) matmul.
    # Padded lanes (bt >= B*T) are excluded, so stats see exactly T frames.
    idx = np.arange(BT_pad)
    onehot = ((idx[:, None] // T) == np.arange(B)[None, :]) & (idx[:, None] < BT)
    seg_avg = jnp.asarray(onehot.astype(np.float32) / float(T))     # (BTp, B)
    seg_bc = jnp.asarray(onehot.T.astype(np.float32))               # (B, BTp)

    # Advisory cost estimate so XLA schedules the surrounding ops sensibly.
    C = DEC_HIDDEN
    flops = (2 * BT_pad * (C * C_MOTION + C * C + C_MOTION * C)     # 1x1 convs
             + 16 * C * BT_pad * B                                  # stats + broadcasts
             + 2 * B * (MLP_HIDDEN * STYLE_DIM + MLP_HIDDEN * MLP_HIDDEN
                        + NUM_ADAIN_PARAMS * MLP_HIDDEN))           # MLP
    bytes_accessed = 4 * (C_MOTION * BT_pad * 2 + STYLE_DIM * B
                          + BT_pad * B * 2 + WSLAB_ROWS * 128 + BSLAB_ROWS)

    out2d = pl.pallas_call(
        _decode_fused_kernel,
        out_shape=jax.ShapeDtypeStruct((C_MOTION, BT_pad), jnp.float32),
        grid=(1,),
        in_specs=[
            _full2d((C_MOTION, BT_pad)),
            _full2d((STYLE_DIM, B)),
            _full2d((BT_pad, B)),
            _full2d((B, BT_pad)),
            _full2d((WSLAB_ROWS, 128)),
            _full2d((BSLAB_ROWS, 1)),
        ],
        out_specs=_full2d((C_MOTION, BT_pad)),
        compiler_params=pltpu.CompilerParams(dimension_semantics=("arbitrary",)),
        cost_estimate=pl.CostEstimate(flops=int(flops), transcendentals=int(2 * C * B),
                                      bytes_accessed=int(bytes_accessed)),
    )(x2d, code_t, seg_avg, seg_bc, p["wslab"], p["bslab"])

    out2d = out2d[:, :BT]                                           # drop padded lanes
    pos = jnp.transpose(out2d.reshape(C_MOTION, B, T), (1, 0, 2))   # (B, 63, T)
    return pos.reshape(B, NJOINTS, NFEATS, num_frames)


# ---------------------------------------------------------------------------
# Pure-JAX reference for verification
# ---------------------------------------------------------------------------
def _ref_decode(content, model_code, p, num_frames):
    B = content.shape[0]
    T = content.shape[3]
    c = jnp.transpose(content, (0, 2, 1, 3)).reshape(B, C_MOTION, T)
    h = jnp.maximum(model_code @ p["mlp_w1t"].T + p["mlp_b1"][:, 0], 0.0)
    h = jnp.maximum(h @ p["mlp_w2t"].T + p["mlp_b2"][:, 0], 0.0)
    ap = h @ p["mlp_w3t"].T + p["mlp_b3"][:, 0]                     # (B, 4*H)
    b1 = ap[:, :DEC_HIDDEN]
    w1 = ap[:, DEC_HIDDEN:2 * DEC_HIDDEN]
    rest = ap[:, 2 * DEC_HIDDEN:]
    b2 = rest[:, :DEC_HIDDEN]
    w2 = rest[:, DEC_HIDDEN:2 * DEC_HIDDEN]

    def layer(x, w, aw, ab):
        hh = jnp.einsum("oc,bct->bot", w, x)
        m = jnp.mean(hh, axis=-1, keepdims=True)
        v = jnp.mean((hh - m) ** 2, axis=-1, keepdims=True)
        hn = (hh - m) * jax.lax.rsqrt(v + 1e-5)
        y = aw[:, :, None] * hn + ab[:, :, None]
        return jnp.where(y > 0, y, 0.2 * y)

    h = layer(c, p["dec_w1"], w1, b1)
    h = layer(h, p["dec_w2"], w2, b2)
    pos = jnp.einsum("oc,bct->bot", p["dec_w3"], h) + p["dec_b3"][None, :, :]
    return pos.reshape(B, NJOINTS, NFEATS, num_frames)


# ---------------------------------------------------------------------------
if __name__ == "__main__":
    B = 2
    T = 8   # num_frames

    key = jax.random.PRNGKey(0)
    k_param, k_content, k_style = jax.random.split(key, 3)
    params = init_params(k_param)

    content_x = jax.random.normal(k_content, (B, NJOINTS, NFEATS, T), jnp.float32)
    style_x = jax.random.normal(k_style, (B, NJOINTS, NFEATS, T), jnp.float32)

    # style path: EncoderStyle(style) -> decode(content, style_code)
    encoded_style = style_encoder(style_x, params)                  # (B, STYLE_DIM)
    rxr_style = decode(content_x, encoded_style, params, num_frames=T)
    rxr_style = jax.block_until_ready(rxr_style)

    ref = _ref_decode(content_x, encoded_style, params, T)
    np.testing.assert_allclose(np.asarray(rxr_style), np.asarray(ref),
                               rtol=1e-4, atol=1e-4)
    assert rxr_style.shape == (B, NJOINTS, NFEATS, T)

    print("KERNEL_OK")
</pallas_src>

<mosaic_0001>
module attributes {stable_mosaic.version = 11 : i64} {
  func.func @_decode_fused_kernel(%arg0: i32, %arg1: memref<63x128xf32, #tpu.memory_space<vmem>>, %arg2: memref<16x2xf32, #tpu.memory_space<vmem>>, %arg3: memref<128x2xf32, #tpu.memory_space<vmem>>, %arg4: memref<2x128xf32, #tpu.memory_space<vmem>>, %arg5: memref<512x128xf32, #tpu.memory_space<vmem>>, %arg6: memref<384x1xf32, #tpu.memory_space<vmem>>, %arg7: memref<63x128xf32, #tpu.memory_space<vmem>>) attributes {dimension_semantics = [#tpu.dimension_semantics<arbitrary>], iteration_bounds = array<i64: 1>, scalar_prefetch = 0 : i64, scratch_operands = 0 : i64, tpu.core_type = #tpu.core_type<tc>, window_params = [{pipeline_mode = #tpu.pipeline_mode<synchronous>, transform_indices = @transform_0, window_bounds = array<i64: 63, 128>}, {pipeline_mode = #tpu.pipeline_mode<synchronous>, transform_indices = @transform_1, window_bounds = array<i64: 16, 2>}, {pipeline_mode = #tpu.pipeline_mode<synchronous>, transform_indices = @transform_2, window_bounds = array<i64: 128, 2>}, {pipeline_mode = #tpu.pipeline_mode<synchronous>, transform_indices = @transform_3, window_bounds = array<i64: 2, 128>}, {pipeline_mode = #tpu.pipeline_mode<synchronous>, transform_indices = @transform_4, window_bounds = array<i64: 512, 128>}, {pipeline_mode = #tpu.pipeline_mode<synchronous>, transform_indices = @transform_5, window_bounds = array<i64: 384, 1>}, {pipeline_mode = #tpu.pipeline_mode<synchronous>, transform_indices = @transform_6, window_bounds = array<i64: 63, 128>}]} {
    %c0 = arith.constant 0 : index
    %c0_0 = arith.constant 0 : index
    %0 = vector.load %arg3[%c0, %c0_0] : memref<128x2xf32, #tpu.memory_space<vmem>>, vector<128x2xf32>
    %c0_1 = arith.constant 0 : index
    %c0_2 = arith.constant 0 : index
    %1 = vector.load %arg4[%c0_1, %c0_2] : memref<2x128xf32, #tpu.memory_space<vmem>>, vector<2x128xf32>
    %c192 = arith.constant 192 : index
    %c0_3 = arith.constant 0 : index
    %2 = vector.load %arg5[%c192, %c0_3] : memref<512x128xf32, #tpu.memory_space<vmem>>, vector<32x16xf32>
    %c0_4 = arith.constant 0 : index
    %c0_5 = arith.constant 0 : index
    %3 = vector.load %arg2[%c0_4, %c0_5] : memref<16x2xf32, #tpu.memory_space<vmem>>, vector<16x2xf32>
    %cst = arith.constant dense<0.000000e+00> : vector<32x2xf32>
    %4 = tpu.matmul %2, %3, %cst {dimension_numbers = #tpu.dot_dimension_numbers<[1], [0], [0], [1], [0, 0, 1, 1], [], []>} : vector<32x16xf32>, vector<16x2xf32>, vector<32x2xf32> -> vector<32x2xf32>
    %c0_6 = arith.constant 0 : index
    %c0_7 = arith.constant 0 : index
    %5 = vector.load %arg6[%c0_6, %c0_7] : memref<384x1xf32, #tpu.memory_space<vmem>>, vector<32x1xf32>
    %6 = vector.broadcast %5 : vector<32x1xf32> to vector<32x2xf32>
    %7 = arith.addf %4, %6 : vector<32x2xf32>
    %cst_8 = arith.constant 0.000000e+00 : f32
    %8 = vector.broadcast %cst_8 : f32 to vector<32x2xf32>
    %9 = arith.maximumf %7, %8 : vector<32x2xf32>
    %c224 = arith.constant 224 : index
    %c0_9 = arith.constant 0 : index
    %10 = vector.load %arg5[%c224, %c0_9] : memref<512x128xf32, #tpu.memory_space<vmem>>, vector<32x32xf32>
    %cst_10 = arith.constant dense<0.000000e+00> : vector<32x2xf32>
    %11 = tpu.matmul %10, %9, %cst_10 {dimension_numbers = #tpu.dot_dimension_numbers<[1], [0], [0], [1], [0, 0, 1, 1], [], []>} : vector<32x32xf32>, vector<32x2xf32>, vector<32x2xf32> -> vector<32x2xf32>
    %c32 = arith.constant 32 : index
    %c0_11 = arith.constant 0 : index
    %12 = vector.load %arg6[%c32, %c0_11] : memref<384x1xf32, #tpu.memory_space<vmem>>, vector<32x1xf32>
    %13 = vector.broadcast %12 : vector<32x1xf32> to vector<32x2xf32>
    %14 = arith.addf %11, %13 : vector<32x2xf32>
    %cst_12 = arith.constant 0.000000e+00 : f32
    %15 = vector.broadcast %cst_12 : f32 to vector<32x2xf32>
    %16 = arith.maximumf %14, %15 : vector<32x2xf32>
    %c256 = arith.constant 256 : index
    %c0_13 = arith.constant 0 : index
    %17 = vector.load %arg5[%c256, %c0_13] : memref<512x128xf32, #tpu.memory_space<vmem>>, vector<256x32xf32>
    %cst_14 = arith.constant dense<0.000000e+00> : vector<256x2xf32>
    %18 = tpu.matmul %17, %16, %cst_14 {dimension_numbers = #tpu.dot_dimension_numbers<[1], [0], [0], [1], [0, 0, 1, 1], [], []>} : vector<256x32xf32>, vector<32x2xf32>, vector<256x2xf32> -> vector<256x2xf32>
    %c64 = arith.constant 64 : index
    %c0_15 = arith.constant 0 : index
    %19 = vector.load %arg6[%c64, %c0_15] : memref<384x1xf32, #tpu.memory_space<vmem>>, vector<256x1xf32>
    %20 = vector.broadcast %19 : vector<256x1xf32> to vector<256x2xf32>
    %21 = arith.addf %18, %20 : vector<256x2xf32>
    %22 = vector.extract_strided_slice %21 {offsets = [0, 0], sizes = [64, 2], strides = [1, 1]} : vector<256x2xf32> to vector<64x2xf32>
    %23 = vector.extract_strided_slice %21 {offsets = [64, 0], sizes = [64, 2], strides = [1, 1]} : vector<256x2xf32> to vector<64x2xf32>
    %24 = vector.extract_strided_slice %21 {offsets = [128, 0], sizes = [64, 2], strides = [1, 1]} : vector<256x2xf32> to vector<64x2xf32>
    %25 = vector.extract_strided_slice %21 {offsets = [192, 0], sizes = [64, 2], strides = [1, 1]} : vector<256x2xf32> to vector<64x2xf32>
    %c0_16 = arith.constant 0 : index
    %c0_17 = arith.constant 0 : index
    %26 = vector.load %arg1[%c0_16, %c0_17] : memref<63x128xf32, #tpu.memory_space<vmem>>, vector<63x128xf32>
    %c0_18 = arith.constant 0 : index
    %c0_19 = arith.constant 0 : index
    %27 = vector.load %arg5[%c0_18, %c0_19] : memref<512x128xf32, #tpu.memory_space<vmem>>, vector<64x63xf32>
    %cst_20 = arith.constant dense<0.000000e+00> : vector<64x128xf32>
    %28 = tpu.matmul %27, %26, %cst_20 {dimension_numbers = #tpu.dot_dimension_numbers<[1], [0], [0], [1], [0, 0, 1, 1], [], []>} : vector<64x63xf32>, vector<63x128xf32>, vector<64x128xf32> -> vector<64x128xf32>
    %29 = arith.mulf %28, %28 : vector<64x128xf32>
    %30 = tpu.concatenate %28, %29 in 0 : vector<64x128xf32>, vector<64x128xf32> -> vector<128x128xf32>
    %cst_21 = arith.constant dense<0.000000e+00> : vector<128x2xf32>
    %31 = tpu.matmul %30, %0, %cst_21 {dimension_numbers = #tpu.dot_dimension_numbers<[1], [0], [0], [1], [0, 0, 1, 1], [], []>} : vector<128x128xf32>, vector<128x2xf32>, vector<128x2xf32> -> vector<128x2xf32>
    %32 = vector.extract_strided_slice %31 {offsets = [0, 0], sizes = [64, 2], strides = [1, 1]} : vector<128x2xf32> to vector<64x2xf32>
    %33 = vector.extract_strided_slice %31 {offsets = [64, 0], sizes = [64, 2], strides = [1, 1]} : vector<128x2xf32> to vector<64x2xf32>
    %34 = arith.mulf %32, %32 : vector<64x2xf32>
    %35 = arith.subf %33, %34 : vector<64x2xf32>
    %cst_22 = arith.constant 9.99999974E-6 : f32
    %36 = vector.broadcast %cst_22 : f32 to vector<64x2xf32>
    %37 = arith.addf %35, %36 : vector<64x2xf32>
    %38 = math.rsqrt %37 : vector<64x2xf32>
    %39 = arith.mulf %23, %38 : vector<64x2xf32>
    %40 = arith.mulf %39, %32 : vector<64x2xf32>
    %41 = arith.subf %22, %40 : vector<64x2xf32>
    %42 = tpu.concatenate %39, %41 in 0 : vector<64x2xf32>, vector<64x2xf32> -> vector<128x2xf32>
    %cst_23 = arith.constant dense<0.000000e+00> : vector<128x128xf32>
    %43 = tpu.matmul %42, %1, %cst_23 {dimension_numbers = #tpu.dot_dimension_numbers<[1], [0], [0], [1], [0, 0, 1, 1], [], []>} : vector<128x2xf32>, vector<2x128xf32>, vector<128x128xf32> -> vector<128x128xf32>
    %44 = vector.extract_strided_slice %43 {offsets = [0, 0], sizes = [64, 128], strides = [1, 1]} : vector<128x128xf32> to vector<64x128xf32>
    %45 = arith.mulf %44, %28 : vector<64x128xf32>
    %46 = vector.extract_strided_slice %43 {offsets = [64, 0], sizes = [64, 128], strides = [1, 1]} : vector<128x128xf32> to vector<64x128xf32>
    %47 = arith.addf %45, %46 : vector<64x128xf32>
    %cst_24 = arith.constant 0.000000e+00 : f32
    %48 = vector.broadcast %cst_24 : f32 to vector<64x128xf32>
    %49 = arith.cmpf ogt, %47, %48 : vector<64x128xf32>
    %cst_25 = arith.constant 2.000000e-01 : f32
    %50 = vector.broadcast %cst_25 : f32 to vector<64x128xf32>
    %51 = arith.mulf %50, %47 : vector<64x128xf32>
    %52 = arith.select %49, %47, %51 : vector<64x128xi1>, vector<64x128xf32>
    %c64_26 = arith.constant 64 : index
    %c0_27 = arith.constant 0 : index
    %53 = vector.load %arg5[%c64_26, %c0_27] : memref<512x128xf32, #tpu.memory_space<vmem>>, vector<64x64xf32>
    %cst_28 = arith.constant dense<0.000000e+00> : vector<64x128xf32>
    %54 = tpu.matmul %53, %52, %cst_28 {dimension_numbers = #tpu.dot_dimension_numbers<[1], [0], [0], [1], [0, 0, 1, 1], [], []>} : vector<64x64xf32>, vector<64x128xf32>, vector<64x128xf32> -> vector<64x128xf32>
    %55 = arith.mulf %54, %54 : vector<64x128xf32>
    %56 = tpu.concatenate %54, %55 in 0 : vector<64x128xf32>, vector<64x128xf32> -> vector<128x128xf32>
    %cst_29 = arith.constant dense<0.000000e+00> : vector<128x2xf32>
    %57 = tpu.matmul %56, %0, %cst_29 {dimension_numbers = #tpu.dot_dimension_numbers<[1], [0], [0], [1], [0, 0, 1, 1], [], []>} : vector<128x128xf32>, vector<128x2xf32>, vector<128x2xf32> -> vector<128x2xf32>
    %58 = vector.extract_strided_slice %57 {offsets = [0, 0], sizes = [64, 2], strides = [1, 1]} : vector<128x2xf32> to vector<64x2xf32>
    %59 = vector.extract_strided_slice %57 {offsets = [64, 0], sizes = [64, 2], strides = [1, 1]} : vector<128x2xf32> to vector<64x2xf32>
    %60 = arith.mulf %58, %58 : vector<64x2xf32>
    %61 = arith.subf %59, %60 : vector<64x2xf32>
    %cst_30 = arith.constant 9.99999974E-6 : f32
    %62 = vector.broadcast %cst_30 : f32 to vector<64x2xf32>
    %63 = arith.addf %61, %62 : vector<64x2xf32>
    %64 = math.rsqrt %63 : vector<64x2xf32>
    %65 = arith.mulf %25, %64 : vector<64x2xf32>
    %66 = arith.mulf %65, %58 : vector<64x2xf32>
    %67 = arith.subf %24, %66 : vector<64x2xf32>
    %68 = tpu.concatenate %65, %67 in 0 : vector<64x2xf32>, vector<64x2xf32> -> vector<128x2xf32>
    %cst_31 = arith.constant dense<0.000000e+00> : vector<128x128xf32>
    %69 = tpu.matmul %68, %1, %cst_31 {dimension_numbers = #tpu.dot_dimension_numbers<[1], [0], [0], [1], [0, 0, 1, 1], [], []>} : vector<128x2xf32>, vector<2x128xf32>, vector<128x128xf32> -> vector<128x128xf32>
    %70 = vector.extract_strided_slice %69 {offsets = [0, 0], sizes = [64, 128], strides = [1, 1]} : vector<128x128xf32> to vector<64x128xf32>
    %71 = arith.mulf %70, %54 : vector<64x128xf32>
    %72 = vector.extract_strided_slice %69 {offsets = [64, 0], sizes = [64, 128], strides = [1, 1]} : vector<128x128xf32> to vector<64x128xf32>
    %73 = arith.addf %71, %72 : vector<64x128xf32>
    %cst_32 = arith.constant 0.000000e+00 : f32
    %74 = vector.broadcast %cst_32 : f32 to vector<64x128xf32>
    %75 = arith.cmpf ogt, %73, %74 : vector<64x128xf32>
    %cst_33 = arith.constant 2.000000e-01 : f32
    %76 = vector.broadcast %cst_33 : f32 to vector<64x128xf32>
    %77 = arith.mulf %76, %73 : vector<64x128xf32>
    %78 = arith.select %75, %73, %77 : vector<64x128xi1>, vector<64x128xf32>
    %c128 = arith.constant 128 : index
    %c0_34 = arith.constant 0 : index
    %79 = vector.load %arg5[%c128, %c0_34] : memref<512x128xf32, #tpu.memory_space<vmem>>, vector<63x64xf32>
    %cst_35 = arith.constant dense<0.000000e+00> : vector<63x128xf32>
    %80 = tpu.matmul %79, %78, %cst_35 {dimension_numbers = #tpu.dot_dimension_numbers<[1], [0], [0], [1], [0, 0, 1, 1], [], []>} : vector<63x64xf32>, vector<64x128xf32>, vector<63x128xf32> -> vector<63x128xf32>
    %c320 = arith.constant 320 : index
    %c0_36 = arith.constant 0 : index
    %81 = vector.load %arg6[%c320, %c0_36] : memref<384x1xf32, #tpu.memory_space<vmem>>, vector<63x1xf32>
    %82 = vector.broadcast %81 : vector<63x1xf32> to vector<63x128xf32>
    %83 = arith.addf %80, %82 : vector<63x128xf32>
    %c0_37 = arith.constant 0 : index
    %c0_38 = arith.constant 0 : index
    %84 = vector.load %arg7[%c0_37, %c0_38] : memref<63x128xf32, #tpu.memory_space<vmem>>, vector<63x128xf32>
    tpu.vector_store %arg7[%c0_37, %c0_38], %83 {strides = array<i32>} : memref<63x128xf32, #tpu.memory_space<vmem>>, vector<63x128xf32>,
    return
  }
  func.func @transform_0(%arg0: i32) -> (i32, i32) {
    %c0_i32 = arith.constant 0 : i32
    %c0_i32_0 = arith.constant 0 : i32
    %c0_i32_1 = arith.constant 0 : i32
    return %c0_i32, %c0_i32_0 : i32, i32
  }
  func.func @transform_1(%arg0: i32) -> (i32, i32) {
    %c0_i32 = arith.constant 0 : i32
    %c0_i32_0 = arith.constant 0 : i32
    %c0_i32_1 = arith.constant 0 : i32
    return %c0_i32, %c0_i32_0 : i32, i32
  }
  func.func @transform_2(%arg0: i32) -> (i32, i32) {
    %c0_i32 = arith.constant 0 : i32
    %c0_i32_0 = arith.constant 0 : i32
    %c0_i32_1 = arith.constant 0 : i32
    return %c0_i32, %c0_i32_0 : i32, i32
  }
  func.func @transform_3(%arg0: i32) -> (i32, i32) {
    %c0_i32 = arith.constant 0 : i32
    %c0_i32_0 = arith.constant 0 : i32
    %c0_i32_1 = arith.constant 0 : i32
    return %c0_i32, %c0_i32_0 : i32, i32
  }
  func.func @transform_4(%arg0: i32) -> (i32, i32) {
    %c0_i32 = arith.constant 0 : i32
    %c0_i32_0 = arith.constant 0 : i32
    %c0_i32_1 = arith.constant 0 : i32
    return %c0_i32, %c0_i32_0 : i32, i32
  }
  func.func @transform_5(%arg0: i32) -> (i32, i32) {
    %c0_i32 = arith.constant 0 : i32
    %c0_i32_0 = arith.constant 0 : i32
    %c0_i32_1 = arith.constant 0 : i32
    return %c0_i32, %c0_i32_0 : i32, i32
  }
  func.func @transform_6(%arg0: i32) -> (i32, i32) {
    %c0_i32 = arith.constant 0 : i32
    %c0_i32_0 = arith.constant 0 : i32
    %c0_i32_1 = arith.constant 0 : i32
    return %c0_i32, %c0_i32_0 : i32, i32
  }
}

</mosaic_0001>

<llo_original>
// kernel: decode.1
$region0: #{decode.1}
  #allocation0 [shape = 'u32[]', space=smem, size = 0x4, offset = 0x4, fixed_abs, tag = 'smem constant byte address 0x4 - core index']
  #allocation1 [shape = 'u32[72,128]{1,0:T(1,128)}', space=vmem, size = 0x9000, scoped, tag = 'internal scratch']
  %s0 = inlined_call_operand.vmem [shape: f32[63,128], index: 0, kind: input, shape index: {}]
  %s1 = inlined_call_operand.vmem [shape: f32[16,2], index: 1, kind: input, shape index: {}]
  %s2 = inlined_call_operand.vmem [shape: f32[128,2], index: 2, kind: input, shape index: {}]
  %s3 = inlined_call_operand.vmem [shape: f32[2,128], index: 3, kind: input, shape index: {}]
  %s4 = inlined_call_operand.vmem [shape: f32[512,128], index: 4, kind: input, shape index: {}]
  %s5 = inlined_call_operand.vmem [shape: f32[384,1], index: 5, kind: input, shape index: {}]
  %s6 = inlined_call_operand.vmem [shape: f32[63,128], index: 6, kind: output, shape index: {}]
  %s7 = sld [smem:[#allocation0]]
  $region34: #{decode.1} parent=0
    _
  %s9 = ssub.s32 1, %s7
  %s10 = scalar_select 0, %s9, %s7
  // Predicated region
  $region2: #{decode.1} parent=0 // pred_check
    _
  $region3: #{decode.1} parent=0 // pred_check_branch
    %12 = sbr.rel (0) target = $region5
  $region4: #{decode.1} parent=0 // pred_region
    _
  $region5: #{decode.1} parent=0 // pred_fallthru
    _
  // Predicated region
  $region6: #{decode.1} parent=0 // pred_check
    _
  $region7: #{decode.1} parent=0 // pred_check_branch
    %14 = sbr.rel (0) target = $region9
  $region8: #{decode.1} parent=0 // pred_region
    _
  $region9: #{decode.1} parent=0 // pred_fallthru
    _
  // Predicated region
  $region10: #{decode.1} parent=0 // pred_check
    _
  $region11: #{decode.1} parent=0 // pred_check_branch
    %16 = sbr.rel (0) target = $region13
  $region12: #{decode.1} parent=0 // pred_region
    _
  $region13: #{decode.1} parent=0 // pred_fallthru
    _
  // Predicated region
  $region14: #{decode.1} parent=0 // pred_check
    _
  $region15: #{decode.1} parent=0 // pred_check_branch
    %18 = sbr.rel (0) target = $region17
  $region16: #{decode.1} parent=0 // pred_region
    _
  $region17: #{decode.1} parent=0 // pred_fallthru
    _
  // Predicated region
  $region18: #{decode.1} parent=0 // pred_check
    _
  $region19: #{decode.1} parent=0 // pred_check_branch
    %20 = sbr.rel (0) target = $region21
  $region20: #{decode.1} parent=0 // pred_region
    _
  $region21: #{decode.1} parent=0 // pred_fallthru
    _
  // Predicated region
  $region22: #{decode.1} parent=0 // pred_check
    _
  $region23: #{decode.1} parent=0 // pred_check_branch
    %22 = sbr.rel (0) target = $region25
  $region24: #{decode.1} parent=0 // pred_region
    _
  $region25: #{decode.1} parent=0 // pred_fallthru
    _
  %v23 = vld [vmem:[%s2] sm:$0xff]
  %v24 = vld [vmem:[%s2 + $0x8] sm:$0xff]
  %v25 = vld [vmem:[%s2 + $0x10] sm:$0xff]
  %v26 = vld [vmem:[%s2 + $0x18] sm:$0xff]
  %v27 = vld [vmem:[%s2 + $0x20] sm:$0xff]
  %v28 = vld [vmem:[%s2 + $0x28] sm:$0xff]
  %v29 = vld [vmem:[%s2 + $0x30] sm:$0xff]
  %v30 = vld [vmem:[%s2 + $0x38] sm:$0xff]
  %v31 = vld [vmem:[%s2 + $0x40] sm:$0xff]
  %v32 = vld [vmem:[%s2 + $0x48] sm:$0xff]
  %v33 = vld [vmem:[%s2 + $0x50] sm:$0xff]
  %v34 = vld [vmem:[%s2 + $0x58] sm:$0xff]
  %v35 = vld [vmem:[%s2 + $0x60] sm:$0xff]
  %v36 = vld [vmem:[%s2 + $0x68] sm:$0xff]
  %v37 = vld [vmem:[%s2 + $0x70] sm:$0xff]
  %v38 = vld [vmem:[%s2 + $0x78] sm:$0xff]
  %v39 = vld [vmem:[%s3] sm:$0x3]
  %v40 = vld [vmem:[%s4 + $0xc0] sm:$0xff]
  %v41 = vld [vmem:[%s4 + $0xc8] sm:$0xff]
  %v42 = vld [vmem:[%s4 + $0xd0] sm:$0xff]
  %v43 = vld [vmem:[%s4 + $0xd8] sm:$0xff]
  %v44 = vld [vmem:[%s1] sm:$0xff]
  %v45 = vld [vmem:[%s1 + $0x8] sm:$0xff]
  %v46 = vld [vmem:[%s5] sm:$0xff]
  %v47 = vld [vmem:[%s5 + $0x8] sm:$0xff]
  %v48 = vld [vmem:[%s5 + $0x10] sm:$0xff]
  %v49 = vld [vmem:[%s5 + $0x18] sm:$0xff]
  %51 = vset.pattern.permute.xlu0 0
  %52 = vperm.xlu0 %51, %v46
  %v53 = vpop.permute.xlu0 %52
  %56 = vset.pattern.permute.xlu0 0
  %57 = vperm.xlu0 %56, %v47
  %v58 = vpop.permute.xlu0 %57
  %61 = vset.pattern.permute.xlu0 0
  %62 = vperm.xlu0 %61, %v48
  %v63 = vpop.permute.xlu0 %62
  %66 = vset.pattern.permute.xlu0 0
  %67 = vperm.xlu0 %66, %v49
  %v68 = vpop.permute.xlu0 %67
  %vm70 = vcmask 130048
  %v72 = vsel %vm70, %v40, 0
  %v75 = vsel %vm70, %v41, 0
  %v78 = vsel %vm70, %v42, 0
  %v81 = vsel %vm70, %v43, 0
  %83 = vmatpush.msra.mxu0 0.0
  %84 = vmatpush.msra.mxu0 0.0
  %85 = vmatpush.msra.mxu0 0.0
  %86 = vmatpush.msra.mxu0 0.0
  %87 = vmatpush.msra.mxu0 0.0
  %88 = vmatpush.msra.mxu0 0.0
  %89 = vmatpush.msra.mxu0 0.0
  %90 = vmatpush.msra.mxu0 0.0
  %91 = vmatpush.msra.mxu0 0.0
  %92 = vmatpush.msra.mxu0 0.0
  %93 = vmatpush.msra.mxu0 0.0
  %94 = vmatpush.msra.mxu0 0.0
  %95 = vmatpush.msra.mxu0 0.0
  %96 = vmatpush.msra.mxu0 0.0
  %97 = vmatpush.msra.mxu0 %v45
  %98 = vmatpush.msra.mxu0 %v44
  %99 = vmatmul.f32.gmra.mxu0 %v72
  %v100 = vpop.f32.mrf.mxu0
  %v101 = vadd.f32 %v53, %v100
  %102 = vmatmul.f32.gmra.mxu0 %v75
  %v103 = vpop.f32.mrf.mxu0
  %v104 = vadd.f32 %v58, %v103
  %105 = vmatmul.f32.gmra.mxu0 %v78
  %v106 = vpop.f32.mrf.mxu0
  %v107 = vadd.f32 %v63, %v106
  %108 = vmatmul.f32.gmra.mxu0 %v81
  %v109 = vpop.f32.mrf.mxu0
  %v110 = vadd.f32 %v68, %v109
  %111 = vdwg.mxu0
  %v112 = vmax.f32 %v101, 0.0
  %v113 = vmax.f32 %v104, 0.0
  %v114 = vmax.f32 %v107, 0.0
  %v115 = vmax.f32 %v110, 0.0
  %v116 = vld [vmem:[%s4 + $0xe0] sm:$0xff]
  %v117 = vld [vmem:[%s4 + $0xe8] sm:$0xff]
  %v118 = vld [vmem:[%s4 + $0xf0] sm:$0xff]
  %v119 = vld [vmem:[%s4 + $0xf8] sm:$0xff]
  %v120 = vld [vmem:[%s5 + $0x20] sm:$0xff]
  %v121 = vld [vmem:[%s5 + $0x28] sm:$0xff]
  %v122 = vld [vmem:[%s5 + $0x30] sm:$0xff]
  %v123 = vld [vmem:[%s5 + $0x38] sm:$0xff]
  %125 = vset.pattern.permute.xlu0 0
  %126 = vperm.xlu0 %125, %v120
  %v127 = vpop.permute.xlu0 %126
  %130 = vset.pattern.permute.xlu0 0
  %131 = vperm.xlu0 %130, %v121
  %v132 = vpop.permute.xlu0 %131
  %135 = vset.pattern.permute.xlu0 0
  %136 = vperm.xlu0 %135, %v122
  %v137 = vpop.permute.xlu0 %136
  %140 = vset.pattern.permute.xlu0 0
  %141 = vperm.xlu0 %140, %v123
  %v142 = vpop.permute.xlu0 %141
  %vm144 = vcmask 261120
  %v146 = vsel %vm144, %v116, 0
  %v149 = vsel %vm144, %v117, 0
  %v152 = vsel %vm144, %v118, 0
  %v155 = vsel %vm144, %v119, 0
  %157 = vmatpush.msra.mxu0 0.0
  %158 = vmatpush.msra.mxu0 0.0
  %159 = vmatpush.msra.mxu0 0.0
  %160 = vmatpush.msra.mxu0 0.0
  %161 = vmatpush.msra.mxu0 0.0
  %162 = vmatpush.msra.mxu0 0.0
  %163 = vmatpush.msra.mxu0 0.0
  %164 = vmatpush.msra.mxu0 0.0
  %165 = vmatpush.msra.mxu0 0.0
  %166 = vmatpush.msra.mxu0 0.0
  %167 = vmatpush.msra.mxu0 0.0
  %168 = vmatpush.msra.mxu0 0.0
  %169 = vmatpush.msra.mxu0 %v115
  %170 = vmatpush.msra.mxu0 %v114
  %171 = vmatpush.msra.mxu0 %v113
  %172 = vmatpush.msra.mxu0 %v112
  %173 = vmatmul.f32.gmra.mxu0 %v146
  %v174 = vpop.f32.mrf.mxu0
  %v175 = vadd.f32 %v127, %v174
  %176 = vmatmul.f32.gmra.mxu0 %v149
  %v177 = vpop.f32.mrf.mxu0
  %v178 = vadd.f32 %v132, %v177
  %179 = vmatmul.f32.gmra.mxu0 %v152
  %v180 = vpop.f32.mrf.mxu0
  %v181 = vadd.f32 %v137, %v180
  %182 = vmatmul.f32.gmra.mxu0 %v155
  %v183 = vpop.f32.mrf.mxu0
  %v184 = vadd.f32 %v142, %v183
  %185 = vdwg.mxu0
  %v186 = vmax.f32 %v175, 0.0
  %v187 = vmax.f32 %v178, 0.0
  %v188 = vmax.f32 %v181, 0.0
  %v189 = vmax.f32 %v184, 0.0
  %v190 = vld [vmem:[%s4 + $0x100] sm:$0xff]
  %v191 = vld [vmem:[%s4 + $0x108] sm:$0xff]
  %v192 = vld [vmem:[%s4 + $0x110] sm:$0xff]
  %v193 = vld [vmem:[%s4 + $0x118] sm:$0xff]
  %v194 = vld [vmem:[%s4 + $0x120] sm:$0xff]
  %v195 = vld [vmem:[%s4 + $0x128] sm:$0xff]
  %v196 = vld [vmem:[%s4 + $0x130] sm:$0xff]
  %v197 = vld [vmem:[%s4 + $0x138] sm:$0xff]
  %v198 = vld [vmem:[%s4 + $0x140] sm:$0xff]
  %v199 = vld [vmem:[%s4 + $0x148] sm:$0xff]
  %v200 = vld [vmem:[%s4 + $0x150] sm:$0xff]
  %v201 = vld [vmem:[%s4 + $0x158] sm:$0xff]
  %v202 = vld [vmem:[%s4 + $0x160] sm:$0xff]
  %v203 = vld [vmem:[%s4 + $0x168] sm:$0xff]
  %v204 = vld [vmem:[%s4 + $0x170] sm:$0xff]
  %v205 = vld [vmem:[%s4 + $0x178] sm:$0xff]
  %v206 = vld [vmem:[%s4 + $0x180] sm:$0xff]
  %v207 = vld [vmem:[%s4 + $0x188] sm:$0xff]
  %v208 = vld [vmem:[%s4 + $0x190] sm:$0xff]
  %v209 = vld [vmem:[%s4 + $0x198] sm:$0xff]
  %v210 = vld [vmem:[%s4 + $0x1a0] sm:$0xff]
  %v211 = vld [vmem:[%s4 + $0x1a8] sm:$0xff]
  %v212 = vld [vmem:[%s4 + $0x1b0] sm:$0xff]
  %v213 = vld [vmem:[%s4 + $0x1b8] sm:$0xff]
  %v214 = vld [vmem:[%s4 + $0x1c0] sm:$0xff]
  %v215 = vld [vmem:[%s4 + $0x1c8] sm:$0xff]
  %v216 = vld [vmem:[%s4 + $0x1d0] sm:$0xff]
  %v217 = vld [vmem:[%s4 + $0x1d8] sm:$0xff]
  %v218 = vld [vmem:[%s4 + $0x1e0] sm:$0xff]
  %v219 = vld [vmem:[%s4 + $0x1e8] sm:$0xff]
  %v220 = vld [vmem:[%s4 + $0x1f0] sm:$0xff]
  %v221 = vld [vmem:[%s4 + $0x1f8] sm:$0xff]
  %v222 = vld [vmem:[%s5 + $0x40] sm:$0xff]
  %v223 = vld [vmem:[%s5 + $0x48] sm:$0xff]
  %v224 = vld [vmem:[%s5 + $0x50] sm:$0xff]
  %v225 = vld [vmem:[%s5 + $0x58] sm:$0xff]
  %v226 = vld [vmem:[%s5 + $0x60] sm:$0xff]
  %v227 = vld [vmem:[%s5 + $0x68] sm:$0xff]
  %v228 = vld [vmem:[%s5 + $0x70] sm:$0xff]
  %v229 = vld [vmem:[%s5 + $0x78] sm:$0xff]
  %v230 = vld [vmem:[%s5 + $0x80] sm:$0xff]
  %v231 = vld [vmem:[%s5 + $0x88] sm:$0xff]
  %v232 = vld [vmem:[%s5 + $0x90] sm:$0xff]
  %v233 = vld [vmem:[%s5 + $0x98] sm:$0xff]
  %v234 = vld [vmem:[%s5 + $0xa0] sm:$0xff]
  %v235 = vld [vmem:[%s5 + $0xa8] sm:$0xff]
  %v236 = vld [vmem:[%s5 + $0xb0] sm:$0xff]
  %v237 = vld [vmem:[%s5 + $0xb8] sm:$0xff]
  %v238 = vld [vmem:[%s5 + $0xc0] sm:$0xff]
  %v239 = vld [vmem:[%s5 + $0xc8] sm:$0xff]
  %v240 = vld [vmem:[%s5 + $0xd0] sm:$0xff]
  %v241 = vld [vmem:[%s5 + $0xd8] sm:$0xff]
  %v242 = vld [vmem:[%s5 + $0xe0] sm:$0xff]
  %v243 = vld [vmem:[%s5 + $0xe8] sm:$0xff]
  %v244 = vld [vmem:[%s5 + $0xf0] sm:$0xff]
  %v245 = vld [vmem:[%s5 + $0xf8] sm:$0xff]
  %v246 = vld [vmem:[%s5 + $0x100] sm:$0xff]
  %v247 = vld [vmem:[%s5 + $0x108] sm:$0xff]
  %v248 = vld [vmem:[%s5 + $0x110] sm:$0xff]
  %v249 = vld [vmem:[%s5 + $0x118] sm:$0xff]
  %v250 = vld [vmem:[%s5 + $0x120] sm:$0xff]
  %v251 = vld [vmem:[%s5 + $0x128] sm:$0xff]
  %v252 = vld [vmem:[%s5 + $0x130] sm:$0xff]
  %v253 = vld [vmem:[%s5 + $0x138] sm:$0xff]
  %255 = vset.pattern.permute.xlu0 0
  %256 = vperm.xlu0 %255, %v222
  %v257 = vpop.permute.xlu0 %256
  %260 = vset.pattern.permute.xlu0 0
  %261 = vperm.xlu0 %260, %v223
  %v262 = vpop.permute.xlu0 %261
  %265 = vset.pattern.permute.xlu0 0
  %266 = vperm.xlu0 %265, %v224
  %v267 = vpop.permute.xlu0 %266
  %270 = vset.pattern.permute.xlu0 0
  %271 = vperm.xlu0 %270, %v225
  %v272 = vpop.permute.xlu0 %271
  %275 = vset.pattern.permute.xlu0 0
  %276 = vperm.xlu0 %275, %v226
  %v277 = vpop.permute.xlu0 %276
  %280 = vset.pattern.permute.xlu0 0
  %281 = vperm.xlu0 %280, %v227
  %v282 = vpop.permute.xlu0 %281
  %285 = vset.pattern.permute.xlu0 0
  %286 = vperm.xlu0 %285, %v228
  %v287 = vpop.permute.xlu0 %286
  %290 = vset.pattern.permute.xlu0 0
  %291 = vperm.xlu0 %290, %v229
  %v292 = vpop.permute.xlu0 %291
  %295 = vset.pattern.permute.xlu0 0
  %296 = vperm.xlu0 %295, %v230
  %v297 = vpop.permute.xlu0 %296
  %300 = vset.pattern.permute.xlu0 0
  %301 = vperm.xlu0 %300, %v231
  %v302 = vpop.permute.xlu0 %301
  %305 = vset.pattern.permute.xlu0 0
  %306 = vperm.xlu0 %305, %v232
  %v307 = vpop.permute.xlu0 %306
  %310 = vset.pattern.permute.xlu0 0
  %311 = vperm.xlu0 %310, %v233
  %v312 = vpop.permute.xlu0 %311
  %315 = vset.pattern.permute.xlu0 0
  %316 = vperm.xlu0 %315, %v234
  %v317 = vpop.permute.xlu0 %316
  %320 = vset.pattern.permute.xlu0 0
  %321 = vperm.xlu0 %320, %v235
  %v322 = vpop.permute.xlu0 %321
  %325 = vset.pattern.permute.xlu0 0
  %326 = vperm.xlu0 %325, %v236
  %v327 = vpop.permute.xlu0 %326
  %330 = vset.pattern.permute.xlu0 0
  %331 = vperm.xlu0 %330, %v237
  %v332 = vpop.permute.xlu0 %331
  %335 = vset.pattern.permute.xlu0 0
  %336 = vperm.xlu0 %335, %v238
  %v337 = vpop.permute.xlu0 %336
  %340 = vset.pattern.permute.xlu0 0
  %341 = vperm.xlu0 %340, %v239
  %v342 = vpop.permute.xlu0 %341
  %345 = vset.pattern.permute.xlu0 0
  %346 = vperm.xlu0 %345, %v240
  %v347 = vpop.permute.xlu0 %346
  %350 = vset.pattern.permute.xlu0 0
  %351 = vperm.xlu0 %350, %v241
  %v352 = vpop.permute.xlu0 %351
  %355 = vset.pattern.permute.xlu0 0
  %356 = vperm.xlu0 %355, %v242
  %v357 = vpop.permute.xlu0 %356
  %360 = vset.pattern.permute.xlu0 0
  %361 = vperm.xlu0 %360, %v243
  %v362 = vpop.permute.xlu0 %361
  %365 = vset.pattern.permute.xlu0 0
  %366 = vperm.xlu0 %365, %v244
  %v367 = vpop.permute.xlu0 %366
  %370 = vset.pattern.permute.xlu0 0
  %371 = vperm.xlu0 %370, %v245
  %v372 = vpop.permute.xlu0 %371
  %375 = vset.pattern.permute.xlu0 0
  %376 = vperm.xlu0 %375, %v246
  %v377 = vpop.permute.xlu0 %376
  %380 = vset.pattern.permute.xlu0 0
  %381 = vperm.xlu0 %380, %v247
  %v382 = vpop.permute.xlu0 %381
  %385 = vset.pattern.permute.xlu0 0
  %386 = vperm.xlu0 %385, %v248
  %v387 = vpop.permute.xlu0 %386
  %390 = vset.pattern.permute.xlu0 0
  %391 = vperm.xlu0 %390, %v249
  %v392 = vpop.permute.xlu0 %391
  %395 = vset.pattern.permute.xlu0 0
  %396 = vperm.xlu0 %395, %v250
  %v397 = vpop.permute.xlu0 %396
  %400 = vset.pattern.permute.xlu0 0
  %401 = vperm.xlu0 %400, %v251
  %v402 = vpop.permute.xlu0 %401
  %405 = vset.pattern.permute.xlu0 0
  %406 = vperm.xlu0 %405, %v252
  %v407 = vpop.permute.xlu0 %406
  %410 = vset.pattern.permute.xlu0 0
  %411 = vperm.xlu0 %410, %v253
  %v412 = vpop.permute.xlu0 %411
  %v415 = vsel %vm144, %v190, 0
  %v418 = vsel %vm144, %v191, 0
  %v421 = vsel %vm144, %v192, 0
  %v424 = vsel %vm144, %v193, 0
  %v427 = vsel %vm144, %v194, 0
  %v430 = vsel %vm144, %v195, 0
  %v433 = vsel %vm144, %v196, 0
  %v436 = vsel %vm144, %v197, 0
  %v439 = vsel %vm144, %v198, 0
  %v442 = vsel %vm144, %v199, 0
  %v445 = vsel %vm144, %v200, 0
  %v448 = vsel %vm144, %v201, 0
  %v451 = vsel %vm144, %v202, 0
  %v454 = vsel %vm144, %v203, 0
  %v457 = vsel %vm144, %v204, 0
  %v460 = vsel %vm144, %v205, 0
  %v463 = vsel %vm144, %v206, 0
  %v466 = vsel %vm144, %v207, 0
  %v469 = vsel %vm144, %v208, 0
  %v472 = vsel %vm144, %v209, 0
  %v475 = vsel %vm144, %v210, 0
  %v478 = vsel %vm144, %v211, 0
  %v481 = vsel %vm144, %v212, 0
  %v484 = vsel %vm144, %v213, 0
  %v487 = vsel %vm144, %v214, 0
  %v490 = vsel %vm144, %v215, 0
  %v493 = vsel %vm144, %v216, 0
  %v496 = vsel %vm144, %v217, 0
  %v499 = vsel %vm144, %v218, 0
  %v502 = vsel %vm144, %v219, 0
  %v505 = vsel %vm144, %v220, 0
  %v508 = vsel %vm144, %v221, 0
  %510 = vmatpush.msra.mxu0 0.0
  %511 = vmatpush.msra.mxu0 0.0
  %512 = vmatpush.msra.mxu0 0.0
  %513 = vmatpush.msra.mxu0 0.0
  %514 = vmatpush.msra.mxu0 0.0
  %515 = vmatpush.msra.mxu0 0.0
  %516 = vmatpush.msra.mxu0 0.0
  %517 = vmatpush.msra.mxu0 0.0
  %518 = vmatpush.msra.mxu0 0.0
  %519 = vmatpush.msra.mxu0 0.0
  %520 = vmatpush.msra.mxu0 0.0
  %521 = vmatpush.msra.mxu0 0.0
  %522 = vmatpush.msra.mxu0 %v189
  %523 = vmatpush.msra.mxu0 %v188
  %524 = vmatpush.msra.mxu0 %v187
  %525 = vmatpush.msra.mxu0 %v186
  %526 = vmatmul.f32.gmra.mxu0 %v415
  %v527 = vpop.f32.mrf.mxu0
  %v528 = vadd.f32 %v257, %v527
  %529 = vmatmul.f32.gmra.mxu0 %v418
  %v530 = vpop.f32.mrf.mxu0
  %v531 = vadd.f32 %v262, %v530
  %532 = vmatmul.f32.gmra.mxu0 %v421
  %v533 = vpop.f32.mrf.mxu0
  %v534 = vadd.f32 %v267, %v533
  %535 = vmatmul.f32.gmra.mxu0 %v424
  %v536 = vpop.f32.mrf.mxu0
  %v537 = vadd.f32 %v272, %v536
  %538 = vmatmul.f32.gmra.mxu0 %v427
  %v539 = vpop.f32.mrf.mxu0
  %v540 = vadd.f32 %v277, %v539
  %541 = vmatmul.f32.gmra.mxu0 %v430
  %v542 = vpop.f32.mrf.mxu0
  %v543 = vadd.f32 %v282, %v542
  %544 = vmatmul.f32.gmra.mxu0 %v433
  %v545 = vpop.f32.mrf.mxu0
  %v546 = vadd.f32 %v287, %v545
  %547 = vmatmul.f32.gmra.mxu0 %v436
  %v548 = vpop.f32.mrf.mxu0
  %v549 = vadd.f32 %v292, %v548
  %550 = vmatmul.f32.gmra.mxu0 %v439
  %v551 = vpop.f32.mrf.mxu0
  %v552 = vadd.f32 %v297, %v551
  %553 = vmatmul.f32.gmra.mxu0 %v442
  %v554 = vpop.f32.mrf.mxu0
  %v555 = vadd.f32 %v302, %v554
  %556 = vmatmul.f32.gmra.mxu0 %v445
  %v557 = vpop.f32.mrf.mxu0
  %v558 = vadd.f32 %v307, %v557
  %559 = vmatmul.f32.gmra.mxu0 %v448
  %v560 = vpop.f32.mrf.mxu0
  %v561 = vadd.f32 %v312, %v560
  %562 = vmatmul.f32.gmra.mxu0 %v451
  %v563 = vpop.f32.mrf.mxu0
  %v564 = vadd.f32 %v317, %v563
  %565 = vmatmul.f32.gmra.mxu0 %v454
  %v566 = vpop.f32.mrf.mxu0
  %v567 = vadd.f32 %v322, %v566
  %568 = vmatmul.f32.gmra.mxu0 %v457
  %v569 = vpop.f32.mrf.mxu0
  %v570 = vadd.f32 %v327, %v569
  %571 = vmatmul.f32.gmra.mxu0 %v460
  %v572 = vpop.f32.mrf.mxu0
  %v573 = vadd.f32 %v332, %v572
  %574 = vmatmul.f32.gmra.mxu0 %v463
  %v575 = vpop.f32.mrf.mxu0
  %v576 = vadd.f32 %v337, %v575
  %577 = vmatmul.f32.gmra.mxu0 %v466
  %v578 = vpop.f32.mrf.mxu0
  %v579 = vadd.f32 %v342, %v578
  %580 = vmatmul.f32.gmra.mxu0 %v469
  %v581 = vpop.f32.mrf.mxu0
  %v582 = vadd.f32 %v347, %v581
  %583 = vmatmul.f32.gmra.mxu0 %v472
  %v584 = vpop.f32.mrf.mxu0
  %v585 = vadd.f32 %v352, %v584
  %586 = vmatmul.f32.gmra.mxu0 %v475
  %v587 = vpop.f32.mrf.mxu0
  %v588 = vadd.f32 %v357, %v587
  %589 = vmatmul.f32.gmra.mxu0 %v478
  %v590 = vpop.f32.mrf.mxu0
  %v591 = vadd.f32 %v362, %v590
  %592 = vmatmul.f32.gmra.mxu0 %v481
  %v593 = vpop.f32.mrf.mxu0
  %v594 = vadd.f32 %v367, %v593
  %595 = vmatmul.f32.gmra.mxu0 %v484
  %v596 = vpop.f32.mrf.mxu0
  %v597 = vadd.f32 %v372, %v596
  %598 = vmatmul.f32.gmra.mxu0 %v487
  %v599 = vpop.f32.mrf.mxu0
  %v600 = vadd.f32 %v377, %v599
  %601 = vmatmul.f32.gmra.mxu0 %v490
  %v602 = vpop.f32.mrf.mxu0
  %v603 = vadd.f32 %v382, %v602
  %604 = vmatmul.f32.gmra.mxu0 %v493
  %v605 = vpop.f32.mrf.mxu0
  %v606 = vadd.f32 %v387, %v605
  %607 = vmatmul.f32.gmra.mxu0 %v496
  %v608 = vpop.f32.mrf.mxu0
  %v609 = vadd.f32 %v392, %v608
  %610 = vmatmul.f32.gmra.mxu0 %v499
  %v611 = vpop.f32.mrf.mxu0
  %v612 = vadd.f32 %v397, %v611
  %613 = vmatmul.f32.gmra.mxu0 %v502
  %v614 = vpop.f32.mrf.mxu0
  %v615 = vadd.f32 %v402, %v614
  %616 = vmatmul.f32.gmra.mxu0 %v505
  %v617 = vpop.f32.mrf.mxu0
  %v618 = vadd.f32 %v407, %v617
  %619 = vmatmul.f32.gmra.mxu0 %v508
  %v620 = vpop.f32.mrf.mxu0
  %v621 = vadd.f32 %v412, %v620
  %622 = vdwg.mxu0
  %v623 = vld [vmem:[%s0] sm:$0xff]
  %v624 = vld [vmem:[%s0 + $0x8] sm:$0xff]
  %v625 = vld [vmem:[%s0 + $0x10] sm:$0xff]
  %v626 = vld [vmem:[%s0 + $0x18] sm:$0xff]
  %v627 = vld [vmem:[%s0 + $0x20] sm:$0xff]
  %v628 = vld [vmem:[%s0 + $0x28] sm:$0xff]
  %v629 = vld [vmem:[%s0 + $0x30] sm:$0xff]
  %v630 = vld [vmem:[%s0 + $0x38] sm:$0x7f]
  %v631 = vld [vmem:[%s4] sm:$0xff]
  %v632 = vld [vmem:[%s4 + $0x8] sm:$0xff]
  %v633 = vld [vmem:[%s4 + $0x10] sm:$0xff]
  %v634 = vld [vmem:[%s4 + $0x18] sm:$0xff]
  %v635 = vld [vmem:[%s4 + $0x20] sm:$0xff]
  %v636 = vld [vmem:[%s4 + $0x28] sm:$0xff]
  %v637 = vld [vmem:[%s4 + $0x30] sm:$0xff]
  %v638 = vld [vmem:[%s4 + $0x38] sm:$0xff]
  %vm639 = vcmask 515072
  %v641 = vsel %vm639, %v631, 0
  %v644 = vsel %vm639, %v632, 0
  %v647 = vsel %vm639, %v633, 0
  %v650 = vsel %vm639, %v634, 0
  %v653 = vsel %vm639, %v635, 0
  %v656 = vsel %vm639, %v636, 0
  %v659 = vsel %vm639, %v637, 0
  %v662 = vsel %vm639, %v638, 0
  %vm664 = vcmask 1046528
  %v666 = vsel %vm664, %v630, 0
  %668 = vmatpush.msra.mxu0 0.0
  %669 = vmatpush.msra.mxu0 0.0
  %670 = vmatpush.msra.mxu0 0.0
  %671 = vmatpush.msra.mxu0 0.0
  %672 = vmatpush.msra.mxu0 0.0
  %673 = vmatpush.msra.mxu0 0.0
  %674 = vmatpush.msra.mxu0 0.0
  %675 = vmatpush.msra.mxu0 0.0
  %676 = vmatpush.msra.mxu0 %v666
  %677 = vmatpush.msra.mxu0 %v629
  %678 = vmatpush.msra.mxu0 %v628
  %679 = vmatpush.msra.mxu0 %v627
  %680 = vmatpush.msra.mxu0 %v626
  %681 = vmatpush.msra.mxu0 %v625
  %682 = vmatpush.msra.mxu0 %v624
  %683 = vmatpush.msra.mxu0 %v623
  %684 = vmatmul.f32.gmra.mxu0 %v641
  %v685 = vpop.f32.mrf.mxu0
  %v686 = vadd.f32 0.0, %v685
  %687 = vmatmul.f32.gmra.mxu0 %v644
  %v688 = vpop.f32.mrf.mxu0
  %v689 = vadd.f32 0.0, %v688
  %690 = vmatmul.f32.gmra.mxu0 %v647
  %v691 = vpop.f32.mrf.mxu0
  %v692 = vadd.f32 0.0, %v691
  %693 = vmatmul.f32.gmra.mxu0 %v650
  %v694 = vpop.f32.mrf.mxu0
  %v695 = vadd.f32 0.0, %v694
  %696 = vmatmul.f32.gmra.mxu0 %v653
  %v697 = vpop.f32.mrf.mxu0
  %v698 = vadd.f32 0.0, %v697
  %699 = vmatmul.f32.gmra.mxu0 %v656
  %v700 = vpop.f32.mrf.mxu0
  %v701 = vadd.f32 0.0, %v700
  %702 = vmatmul.f32.gmra.mxu0 %v659
  %v703 = vpop.f32.mrf.mxu0
  %v704 = vadd.f32 0.0, %v703
  %705 = vmatmul.f32.gmra.mxu0 %v662
  %v706 = vpop.f32.mrf.mxu0
  %v707 = vadd.f32 0.0, %v706
  %708 = vdwg.mxu0
  %v709 = vmul.f32 %v686, %v686
  %v710 = vmul.f32 %v689, %v689
  %v711 = vmul.f32 %v692, %v692
  %v712 = vmul.f32 %v695, %v695
  %v713 = vmul.f32 %v698, %v698
  %v714 = vmul.f32 %v701, %v701
  %v715 = vmul.f32 %v704, %v704
  %v716 = vmul.f32 %v707, %v707
  %717 = vmatpush.msra.mxu0 %v38
  %718 = vmatpush.msra.mxu0 %v37
  %719 = vmatpush.msra.mxu0 %v36
  %720 = vmatpush.msra.mxu0 %v35
  %721 = vmatpush.msra.mxu0 %v34
  %722 = vmatpush.msra.mxu0 %v33
  %723 = vmatpush.msra.mxu0 %v32
  %724 = vmatpush.msra.mxu0 %v31
  %725 = vmatpush.msra.mxu0 %v30
  %726 = vmatpush.msra.mxu0 %v29
  %727 = vmatpush.msra.mxu0 %v28
  %728 = vmatpush.msra.mxu0 %v27
  %729 = vmatpush.msra.mxu0 %v26
  %730 = vmatpush.msra.mxu0 %v25
  %731 = vmatpush.msra.mxu0 %v24
  %732 = vmatpush.msra.mxu0 %v23
  %733 = vmatmul.f32.gmra.mxu0 %v686
  %v734 = vpop.f32.mrf.mxu0
  %v735 = vadd.f32 0.0, %v734
  %736 = vmatmul.f32.gmra.mxu0 %v689
  %v737 = vpop.f32.mrf.mxu0
  %v738 = vadd.f32 0.0, %v737
  %739 = vmatmul.f32.gmra.mxu0 %v692
  %v740 = vpop.f32.mrf.mxu0
  %v741 = vadd.f32 0.0, %v740
  %742 = vmatmul.f32.gmra.mxu0 %v695
  %v743 = vpop.f32.mrf.mxu0
  %v744 = vadd.f32 0.0, %v743
  %745 = vmatmul.f32.gmra.mxu0 %v698
  %v746 = vpop.f32.mrf.mxu0
  %v747 = vadd.f32 0.0, %v746
  %748 = vmatmul.f32.gmra.mxu0 %v701
  %v749 = vpop.f32.mrf.mxu0
  %v750 = vadd.f32 0.0, %v749
  %751 = vmatmul.f32.gmra.mxu0 %v704
  %v752 = vpop.f32.mrf.mxu0
  %v753 = vadd.f32 0.0, %v752
  %754 = vmatmul.f32.gmra.mxu0 %v707
  %v755 = vpop.f32.mrf.mxu0
  %v756 = vadd.f32 0.0, %v755
  %757 = vmatmul.f32.gmra.mxu0 %v709
  %v758 = vpop.f32.mrf.mxu0
  %v759 = vadd.f32 0.0, %v758
  %760 = vmatmul.f32.gmra.mxu0 %v710
  %v761 = vpop.f32.mrf.mxu0
  %v762 = vadd.f32 0.0, %v761
  %763 = vmatmul.f32.gmra.mxu0 %v711
  %v764 = vpop.f32.mrf.mxu0
  %v765 = vadd.f32 0.0, %v764
  %766 = vmatmul.f32.gmra.mxu0 %v712
  %v767 = vpop.f32.mrf.mxu0
  %v768 = vadd.f32 0.0, %v767
  %769 = vmatmul.f32.gmra.mxu0 %v713
  %v770 = vpop.f32.mrf.mxu0
  %v771 = vadd.f32 0.0, %v770
  %772 = vmatmul.f32.gmra.mxu0 %v714
  %v773 = vpop.f32.mrf.mxu0
  %v774 = vadd.f32 0.0, %v773
  %775 = vmatmul.f32.gmra.mxu0 %v715
  %v776 = vpop.f32.mrf.mxu0
  %v777 = vadd.f32 0.0, %v776
  %778 = vmatmul.f32.gmra.mxu0 %v716
  %v779 = vpop.f32.mrf.mxu0
  %v780 = vadd.f32 0.0, %v779
  %781 = vdwg.mxu0
  %v782 = vmul.f32 %v735, %v735
  %v783 = vmul.f32 %v738, %v738
  %v784 = vmul.f32 %v741, %v741
  %v785 = vmul.f32 %v744, %v744
  %v786 = vmul.f32 %v747, %v747
  %v787 = vmul.f32 %v750, %v750
  %v788 = vmul.f32 %v753, %v753
  %v789 = vmul.f32 %v756, %v756
  %v790 = vsub.f32 %v759, %v782
  %v791 = vsub.f32 %v762, %v783
  %v792 = vsub.f32 %v765, %v784
  %v793 = vsub.f32 %v768, %v785
  %v794 = vsub.f32 %v771, %v786
  %v795 = vsub.f32 %v774, %v787
  %v796 = vsub.f32 %v777, %v788
  %v797 = vsub.f32 %v780, %v789
  %v798 = vadd.f32 %v790, 1e-05
  %v799 = vadd.f32 %v791, 1e-05
  %v800 = vadd.f32 %v792, 1e-05
  %v801 = vadd.f32 %v793, 1e-05
  %v802 = vadd.f32 %v794, 1e-05
  %v803 = vadd.f32 %v795, 1e-05
  %v804 = vadd.f32 %v796, 1e-05
  %v805 = vadd.f32 %v797, 1e-05
  %v806 = vrsqrt.pop %v798
  %v807 = vmul.f32 %v806, %v798
  %v808 = vmul.f32 %v807, %v806
  %v809 = vmul.f32 0.5, %v808
  %v810 = vsub.f32 1.5, %v809
  %v811 = vmul.f32 %v806, %v810
  %vm812 = vweird.f32 %v798
  %vm813 = vweird.f32 %v806
  %vm814 = vmor %vm812, %vm813
  %v815 = vsel %vm814, %v806, %v811
  %v816 = vrsqrt.pop %v799
  %v817 = vmul.f32 %v816, %v799
  %v818 = vmul.f32 %v817, %v816
  %v819 = vmul.f32 0.5, %v818
  %v820 = vsub.f32 1.5, %v819
  %v821 = vmul.f32 %v816, %v820
  %vm822 = vweird.f32 %v799
  %vm823 = vweird.f32 %v816
  %vm824 = vmor %vm822, %vm823
  %v825 = vsel %vm824, %v816, %v821
  %v826 = vrsqrt.pop %v800
  %v827 = vmul.f32 %v826, %v800
  %v828 = vmul.f32 %v827, %v826
  %v829 = vmul.f32 0.5, %v828
  %v830 = vsub.f32 1.5, %v829
  %v831 = vmul.f32 %v826, %v830
  %vm832 = vweird.f32 %v800
  %vm833 = vweird.f32 %v826
  %vm834 = vmor %vm832, %vm833
  %v835 = vsel %vm834, %v826, %v831
  %v836 = vrsqrt.pop %v801
  %v837 = vmul.f32 %v836, %v801
  %v838 = vmul.f32 %v837, %v836
  %v839 = vmul.f32 0.5, %v838
  %v840 = vsub.f32 1.5, %v839
  %v841 = vmul.f32 %v836, %v840
  %vm842 = vweird.f32 %v801
  %vm843 = vweird.f32 %v836
  %vm844 = vmor %vm842, %vm843
  %v845 = vsel %vm844, %v836, %v841
  %v846 = vrsqrt.pop %v802
  %v847 = vmul.f32 %v846, %v802
  %v848 = vmul.f32 %v847, %v846
  %v849 = vmul.f32 0.5, %v848
  %v850 = vsub.f32 1.5, %v849
  %v851 = vmul.f32 %v846, %v850
  %vm852 = vweird.f32 %v802
  %vm853 = vweird.f32 %v846
  %vm854 = vmor %vm852, %vm853
  %v855 = vsel %vm854, %v846, %v851
  %v856 = vrsqrt.pop %v803
  %v857 = vmul.f32 %v856, %v803
  %v858 = vmul.f32 %v857, %v856
  %v859 = vmul.f32 0.5, %v858
  %v860 = vsub.f32 1.5, %v859
  %v861 = vmul.f32 %v856, %v860
  %vm862 = vweird.f32 %v803
  %vm863 = vweird.f32 %v856
  %vm864 = vmor %vm862, %vm863
  %v865 = vsel %vm864, %v856, %v861
  %v866 = vrsqrt.pop %v804
  %v867 = vmul.f32 %v866, %v804
  %v868 = vmul.f32 %v867, %v866
  %v869 = vmul.f32 0.5, %v868
  %v870 = vsub.f32 1.5, %v869
  %v871 = vmul.f32 %v866, %v870
  %vm872 = vweird.f32 %v804
  %vm873 = vweird.f32 %v866
  %vm874 = vmor %vm872, %vm873
  %v875 = vsel %vm874, %v866, %v871
  %v876 = vrsqrt.pop %v805
  %v877 = vmul.f32 %v876, %v805
  %v878 = vmul.f32 %v877, %v876
  %v879 = vmul.f32 0.5, %v878
  %v880 = vsub.f32 1.5, %v879
  %v881 = vmul.f32 %v876, %v880
  %vm882 = vweird.f32 %v805
  %vm883 = vweird.f32 %v876
  %vm884 = vmor %vm882, %vm883
  %v885 = vsel %vm884, %v876, %v881
  %v886 = vmul.f32 %v552, %v815
  %v887 = vmul.f32 %v555, %v825
  %v888 = vmul.f32 %v558, %v835
  %v889 = vmul.f32 %v561, %v845
  %v890 = vmul.f32 %v564, %v855
  %v891 = vmul.f32 %v567, %v865
  %v892 = vmul.f32 %v570, %v875
  %v893 = vmul.f32 %v573, %v885
  %v894 = vmul.f32 %v886, %v735
  %v895 = vmul.f32 %v887, %v738
  %v896 = vmul.f32 %v888, %v741
  %v897 = vmul.f32 %v889, %v744
  %v898 = vmul.f32 %v890, %v747
  %v899 = vmul.f32 %v891, %v750
  %v900 = vmul.f32 %v892, %v753
  %v901 = vmul.f32 %v893, %v756
  %v902 = vsub.f32 %v528, %v894
  %v903 = vsub.f32 %v531, %v895
  %v904 = vsub.f32 %v534, %v896
  %v905 = vsub.f32 %v537, %v897
  %v906 = vsub.f32 %v540, %v898
  %v907 = vsub.f32 %v543, %v899
  %v908 = vsub.f32 %v546, %v900
  %v909 = vsub.f32 %v549, %v901
  %vm910 = vcmask 15360
  %v912 = vsel %vm910, %v886, 0
  %v915 = vsel %vm910, %v887, 0
  %v918 = vsel %vm910, %v888, 0
  %v921 = vsel %vm910, %v889, 0
  %v924 = vsel %vm910, %v890, 0
  %v927 = vsel %vm910, %v891, 0
  %v930 = vsel %vm910, %v892, 0
  %v933 = vsel %vm910, %v893, 0
  %v936 = vsel %vm910, %v902, 0
  %v939 = vsel %vm910, %v903, 0
  %v942 = vsel %vm910, %v904, 0
  %v945 = vsel %vm910, %v905, 0
  %v948 = vsel %vm910, %v906, 0
  %v951 = vsel %vm910, %v907, 0
  %v954 = vsel %vm910, %v908, 0
  %v957 = vsel %vm910, %v909, 0
  %vm959 = vcmask 1041408
  %v961 = vsel %vm959, %v39, 0
  %963 = vmatpush.msra.mxu0 0.0
  %964 = vmatpush.msra.mxu0 0.0
  %965 = vmatpush.msra.mxu0 0.0
  %966 = vmatpush.msra.mxu0 0.0
  %967 = vmatpush.msra.mxu0 0.0
  %968 = vmatpush.msra.mxu0 0.0
  %969 = vmatpush.msra.mxu0 0.0
  %970 = vmatpush.msra.mxu0 0.0
  %971 = vmatpush.msra.mxu0 0.0
  %972 = vmatpush.msra.mxu0 0.0
  %973 = vmatpush.msra.mxu0 0.0
  %974 = vmatpush.msra.mxu0 0.0
  %975 = vmatpush.msra.mxu0 0.0
  %976 = vmatpush.msra.mxu0 0.0
  %977 = vmatpush.msra.mxu0 0.0
  %978 = vmatpush.msra.mxu0 %v961
  %979 = vmatmul.f32.gmra.mxu0 %v912
  %v980 = vpop.f32.mrf.mxu0
  %v981 = vadd.f32 0.0, %v980
  %982 = vmatmul.f32.gmra.mxu0 %v915
  %v983 = vpop.f32.mrf.mxu0
  %v984 = vadd.f32 0.0, %v983
  %985 = vmatmul.f32.gmra.mxu0 %v918
  %v986 = vpop.f32.mrf.mxu0
  %v987 = vadd.f32 0.0, %v986
  %988 = vmatmul.f32.gmra.mxu0 %v921
  %v989 = vpop.f32.mrf.mxu0
  %v990 = vadd.f32 0.0, %v989
  %991 = vmatmul.f32.gmra.mxu0 %v924
  %v992 = vpop.f32.mrf.mxu0
  %v993 = vadd.f32 0.0, %v992
  %994 = vmatmul.f32.gmra.mxu0 %v927
  %v995 = vpop.f32.mrf.mxu0
  %v996 = vadd.f32 0.0, %v995
  %997 = vmatmul.f32.gmra.mxu0 %v930
  %v998 = vpop.f32.mrf.mxu0
  %v999 = vadd.f32 0.0, %v998
  %1000 = vmatmul.f32.gmra.mxu0 %v933
  %v1001 = vpop.f32.mrf.mxu0
  %v1002 = vadd.f32 0.0, %v1001
  %1003 = vmatmul.f32.gmra.mxu0 %v936
  %v1004 = vpop.f32.mrf.mxu0
  %v1005 = vadd.f32 0.0, %v1004
  %1006 = vmatmul.f32.gmra.mxu0 %v939
  %v1007 = vpop.f32.mrf.mxu0
  %v1008 = vadd.f32 0.0, %v1007
  %1009 = vmatmul.f32.gmra.mxu0 %v942
  %v1010 = vpop.f32.mrf.mxu0
  %v1011 = vadd.f32 0.0, %v1010
  %1012 = vmatmul.f32.gmra.mxu0 %v945
  %v1013 = vpop.f32.mrf.mxu0
  %v1014 = vadd.f32 0.0, %v1013
  %1015 = vmatmul.f32.gmra.mxu0 %v948
  %v1016 = vpop.f32.mrf.mxu0
  %v1017 = vadd.f32 0.0, %v1016
  %1018 = vmatmul.f32.gmra.mxu0 %v951
  %v1019 = vpop.f32.mrf.mxu0
  %v1020 = vadd.f32 0.0, %v1019
  %1021 = vmatmul.f32.gmra.mxu0 %v954
  %v1022 = vpop.f32.mrf.mxu0
  %v1023 = vadd.f32 0.0, %v1022
  %1024 = vmatmul.f32.gmra.mxu0 %v957
  %v1025 = vpop.f32.mrf.mxu0
  %v1026 = vadd.f32 0.0, %v1025
  %1027 = vdwg.mxu0
  %v1028 = vmul.f32 %v981, %v686
  %v1029 = vmul.f32 %v984, %v689
  %v1030 = vmul.f32 %v987, %v692
  %v1031 = vmul.f32 %v990, %v695
  %v1032 = vmul.f32 %v993, %v698
  %v1033 = vmul.f32 %v996, %v701
  %v1034 = vmul.f32 %v999, %v704
  %v1035 = vmul.f32 %v1002, %v707
  %v1036 = vadd.f32 %v1028, %v1005
  %v1037 = vadd.f32 %v1029, %v1008
  %v1038 = vadd.f32 %v1030, %v1011
  %v1039 = vadd.f32 %v1031, %v1014
  %v1040 = vadd.f32 %v1032, %v1017
  %v1041 = vadd.f32 %v1033, %v1020
  %v1042 = vadd.f32 %v1034, %v1023
  %v1043 = vadd.f32 %v1035, %v1026
  %vm1044 = vcmp.gt.f32.partialorder %v1036, 0.0
  %vm1045 = vcmp.gt.f32.partialorder %v1037, 0.0
  %vm1046 = vcmp.gt.f32.partialorder %v1038, 0.0
  %vm1047 = vcmp.gt.f32.partialorder %v1039, 0.0
  %vm1048 = vcmp.gt.f32.partialorder %v1040, 0.0
  %vm1049 = vcmp.gt.f32.partialorder %v1041, 0.0
  %vm1050 = vcmp.gt.f32.partialorder %v1042, 0.0
  %vm1051 = vcmp.gt.f32.partialorder %v1043, 0.0
  %v1052 = vmul.f32 %v1036, 0.2
  %v1053 = vmul.f32 %v1037, 0.2
  %v1054 = vmul.f32 %v1038, 0.2
  %v1055 = vmul.f32 %v1039, 0.2
  %v1056 = vmul.f32 %v1040, 0.2
  %v1057 = vmul.f32 %v1041, 0.2
  %v1058 = vmul.f32 %v1042, 0.2
  %v1059 = vmul.f32 %v1043, 0.2
  %v1060 = vsel %vm1044, %v1036, %v1052
  %v1061 = vsel %vm1045, %v1037, %v1053
  %v1062 = vsel %vm1046, %v1038, %v1054
  %v1063 = vsel %vm1047, %v1039, %v1055
  %v1064 = vsel %vm1048, %v1040, %v1056
  %v1065 = vsel %vm1049, %v1041, %v1057
  %v1066 = vsel %vm1050, %v1042, %v1058
  %v1067 = vsel %vm1051, %v1043, %v1059
  %v1068 = vld [vmem:[%s4 + $0x40] sm:$0xff]
  %v1069 = vld [vmem:[%s4 + $0x48] sm:$0xff]
  %v1070 = vld [vmem:[%s4 + $0x50] sm:$0xff]
  %v1071 = vld [vmem:[%s4 + $0x58] sm:$0xff]
  %v1072 = vld [vmem:[%s4 + $0x60] sm:$0xff]
  %v1073 = vld [vmem:[%s4 + $0x68] sm:$0xff]
  %v1074 = vld [vmem:[%s4 + $0x70] sm:$0xff]
  %v1075 = vld [vmem:[%s4 + $0x78] sm:$0xff]
  %vm1076 = vcmask 523264
  %v1078 = vsel %vm1076, %v1068, 0
  %v1081 = vsel %vm1076, %v1069, 0
  %v1084 = vsel %vm1076, %v1070, 0
  %v1087 = vsel %vm1076, %v1071, 0
  %v1090 = vsel %vm1076, %v1072, 0
  %v1093 = vsel %vm1076, %v1073, 0
  %v1096 = vsel %vm1076, %v1074, 0
  %v1099 = vsel %vm1076, %v1075, 0
  %1101 = vmatpush.msra.mxu0 0.0
  %1102 = vmatpush.msra.mxu0 0.0
  %1103 = vmatpush.msra.mxu0 0.0
  %1104 = vmatpush.msra.mxu0 0.0
  %1105 = vmatpush.msra.mxu0 0.0
  %1106 = vmatpush.msra.mxu0 0.0
  %1107 = vmatpush.msra.mxu0 0.0
  %1108 = vmatpush.msra.mxu0 0.0
  %1109 = vmatpush.msra.mxu0 %v1067
  %1110 = vmatpush.msra.mxu0 %v1066
  %1111 = vmatpush.msra.mxu0 %v1065
  %1112 = vmatpush.msra.mxu0 %v1064
  %1113 = vmatpush.msra.mxu0 %v1063
  %1114 = vmatpush.msra.mxu0 %v1062
  %1115 = vmatpush.msra.mxu0 %v1061
  %1116 = vmatpush.msra.mxu0 %v1060
  %1117 = vmatmul.f32.gmra.mxu0 %v1078
  %v1118 = vpop.f32.mrf.mxu0
  %v1119 = vadd.f32 0.0, %v1118
  %1120 = vmatmul.f32.gmra.mxu0 %v1081
  %v1121 = vpop.f32.mrf.mxu0
  %v1122 = vadd.f32 0.0, %v1121
  %1123 = vmatmul.f32.gmra.mxu0 %v1084
  %v1124 = vpop.f32.mrf.mxu0
  %v1125 = vadd.f32 0.0, %v1124
  %1126 = vmatmul.f32.gmra.mxu0 %v1087
  %v1127 = vpop.f32.mrf.mxu0
  %v1128 = vadd.f32 0.0, %v1127
  %1129 = vmatmul.f32.gmra.mxu0 %v1090
  %v1130 = vpop.f32.mrf.mxu0
  %v1131 = vadd.f32 0.0, %v1130
  %1132 = vmatmul.f32.gmra.mxu0 %v1093
  %v1133 = vpop.f32.mrf.mxu0
  %v1134 = vadd.f32 0.0, %v1133
  %1135 = vmatmul.f32.gmra.mxu0 %v1096
  %v1136 = vpop.f32.mrf.mxu0
  %v1137 = vadd.f32 0.0, %v1136
  %1138 = vmatmul.f32.gmra.mxu0 %v1099
  %v1139 = vpop.f32.mrf.mxu0
  %v1140 = vadd.f32 0.0, %v1139
  %1141 = vdwg.mxu0
  %v1142 = vmul.f32 %v1119, %v1119
  %v1143 = vmul.f32 %v1122, %v1122
  %v1144 = vmul.f32 %v1125, %v1125
  %v1145 = vmul.f32 %v1128, %v1128
  %v1146 = vmul.f32 %v1131, %v1131
  %v1147 = vmul.f32 %v1134, %v1134
  %v1148 = vmul.f32 %v1137, %v1137
  %v1149 = vmul.f32 %v1140, %v1140
  %1150 = vmatpush.msra.mxu0 %v38
  %1151 = vmatpush.msra.mxu0 %v37
  %1152 = vmatpush.msra.mxu0 %v36
  %1153 = vmatpush.msra.mxu0 %v35
  %1154 = vmatpush.msra.mxu0 %v34
  %1155 = vmatpush.msra.mxu0 %v33
  %1156 = vmatpush.msra.mxu0 %v32
  %1157 = vmatpush.msra.mxu0 %v31
  %1158 = vmatpush.msra.mxu0 %v30
  %1159 = vmatpush.msra.mxu0 %v29
  %1160 = vmatpush.msra.mxu0 %v28
  %1161 = vmatpush.msra.mxu0 %v27
  %1162 = vmatpush.msra.mxu0 %v26
  %1163 = vmatpush.msra.mxu0 %v25
  %1164 = vmatpush.msra.mxu0 %v24
  %1165 = vmatpush.msra.mxu0 %v23
  %1166 = vmatmul.f32.gmra.mxu0 %v1119
  %v1167 = vpop.f32.mrf.mxu0
  %v1168 = vadd.f32 0.0, %v1167
  %1169 = vmatmul.f32.gmra.mxu0 %v1122
  %v1170 = vpop.f32.mrf.mxu0
  %v1171 = vadd.f32 0.0, %v1170
  %1172 = vmatmul.f32.gmra.mxu0 %v1125
  %v1173 = vpop.f32.mrf.mxu0
  %v1174 = vadd.f32 0.0, %v1173
  %1175 = vmatmul.f32.gmra.mxu0 %v1128
  %v1176 = vpop.f32.mrf.mxu0
  %v1177 = vadd.f32 0.0, %v1176
  %1178 = vmatmul.f32.gmra.mxu0 %v1131
  %v1179 = vpop.f32.mrf.mxu0
  %v1180 = vadd.f32 0.0, %v1179
  %1181 = vmatmul.f32.gmra.mxu0 %v1134
  %v1182 = vpop.f32.mrf.mxu0
  %v1183 = vadd.f32 0.0, %v1182
  %1184 = vmatmul.f32.gmra.mxu0 %v1137
  %v1185 = vpop.f32.mrf.mxu0
  %v1186 = vadd.f32 0.0, %v1185
  %1187 = vmatmul.f32.gmra.mxu0 %v1140
  %v1188 = vpop.f32.mrf.mxu0
  %v1189 = vadd.f32 0.0, %v1188
  %1190 = vmatmul.f32.gmra.mxu0 %v1142
  %v1191 = vpop.f32.mrf.mxu0
  %v1192 = vadd.f32 0.0, %v1191
  %1193 = vmatmul.f32.gmra.mxu0 %v1143
  %v1194 = vpop.f32.mrf.mxu0
  %v1195 = vadd.f32 0.0, %v1194
  %1196 = vmatmul.f32.gmra.mxu0 %v1144
  %v1197 = vpop.f32.mrf.mxu0
  %v1198 = vadd.f32 0.0, %v1197
  %1199 = vmatmul.f32.gmra.mxu0 %v1145
  %v1200 = vpop.f32.mrf.mxu0
  %v1201 = vadd.f32 0.0, %v1200
  %1202 = vmatmul.f32.gmra.mxu0 %v1146
  %v1203 = vpop.f32.mrf.mxu0
  %v1204 = vadd.f32 0.0, %v1203
  %1205 = vmatmul.f32.gmra.mxu0 %v1147
  %v1206 = vpop.f32.mrf.mxu0
  %v1207 = vadd.f32 0.0, %v1206
  %1208 = vmatmul.f32.gmra.mxu0 %v1148
  %v1209 = vpop.f32.mrf.mxu0
  %v1210 = vadd.f32 0.0, %v1209
  %1211 = vmatmul.f32.gmra.mxu0 %v1149
  %v1212 = vpop.f32.mrf.mxu0
  %v1213 = vadd.f32 0.0, %v1212
  %1214 = vdwg.mxu0
  %v1215 = vmul.f32 %v1168, %v1168
  %v1216 = vmul.f32 %v1171, %v1171
  %v1217 = vmul.f32 %v1174, %v1174
  %v1218 = vmul.f32 %v1177, %v1177
  %v1219 = vmul.f32 %v1180, %v1180
  %v1220 = vmul.f32 %v1183, %v1183
  %v1221 = vmul.f32 %v1186, %v1186
  %v1222 = vmul.f32 %v1189, %v1189
  %v1223 = vsub.f32 %v1192, %v1215
  %v1224 = vsub.f32 %v1195, %v1216
  %v1225 = vsub.f32 %v1198, %v1217
  %v1226 = vsub.f32 %v1201, %v1218
  %v1227 = vsub.f32 %v1204, %v1219
  %v1228 = vsub.f32 %v1207, %v1220
  %v1229 = vsub.f32 %v1210, %v1221
  %v1230 = vsub.f32 %v1213, %v1222
  %v1231 = vadd.f32 %v1223, 1e-05
  %v1232 = vadd.f32 %v1224, 1e-05
  %v1233 = vadd.f32 %v1225, 1e-05
  %v1234 = vadd.f32 %v1226, 1e-05
  %v1235 = vadd.f32 %v1227, 1e-05
  %v1236 = vadd.f32 %v1228, 1e-05
  %v1237 = vadd.f32 %v1229, 1e-05
  %v1238 = vadd.f32 %v1230, 1e-05
  %v1239 = vrsqrt.pop %v1231
  %v1240 = vmul.f32 %v1239, %v1231
  %v1241 = vmul.f32 %v1240, %v1239
  %v1242 = vmul.f32 0.5, %v1241
  %v1243 = vsub.f32 1.5, %v1242
  %v1244 = vmul.f32 %v1239, %v1243
  %vm1245 = vweird.f32 %v1231
  %vm1246 = vweird.f32 %v1239
  %vm1247 = vmor %vm1245, %vm1246
  %v1248 = vsel %vm1247, %v1239, %v1244
  %v1249 = vrsqrt.pop %v1232
  %v1250 = vmul.f32 %v1249, %v1232
  %v1251 = vmul.f32 %v1250, %v1249
  %v1252 = vmul.f32 0.5, %v1251
  %v1253 = vsub.f32 1.5, %v1252
  %v1254 = vmul.f32 %v1249, %v1253
  %vm1255 = vweird.f32 %v1232
  %vm1256 = vweird.f32 %v1249
  %vm1257 = vmor %vm1255, %vm1256
  %v1258 = vsel %vm1257, %v1249, %v1254
  %v1259 = vrsqrt.pop %v1233
  %v1260 = vmul.f32 %v1259, %v1233
  %v1261 = vmul.f32 %v1260, %v1259
  %v1262 = vmul.f32 0.5, %v1261
  %v1263 = vsub.f32 1.5, %v1262
  %v1264 = vmul.f32 %v1259, %v1263
  %vm1265 = vweird.f32 %v1233
  %vm1266 = vweird.f32 %v1259
  %vm1267 = vmor %vm1265, %vm1266
  %v1268 = vsel %vm1267, %v1259, %v1264
  %v1269 = vrsqrt.pop %v1234
  %v1270 = vmul.f32 %v1269, %v1234
  %v1271 = vmul.f32 %v1270, %v1269
  %v1272 = vmul.f32 0.5, %v1271
  %v1273 = vsub.f32 1.5, %v1272
  %v1274 = vmul.f32 %v1269, %v1273
  %vm1275 = vweird.f32 %v1234
  %vm1276 = vweird.f32 %v1269
  %vm1277 = vmor %vm1275, %vm1276
  %v1278 = vsel %vm1277, %v1269, %v1274
  %v1279 = vrsqrt.pop %v1235
  %v1280 = vmul.f32 %v1279, %v1235
  %v1281 = vmul.f32 %v1280, %v1279
  %v1282 = vmul.f32 0.5, %v1281
  %v1283 = vsub.f32 1.5, %v1282
  %v1284 = vmul.f32 %v1279, %v1283
  %vm1285 = vweird.f32 %v1235
  %vm1286 = vweird.f32 %v1279
  %vm1287 = vmor %vm1285, %vm1286
  %v1288 = vsel %vm1287, %v1279, %v1284
  %v1289 = vrsqrt.pop %v1236
  %v1290 = vmul.f32 %v1289, %v1236
  %v1291 = vmul.f32 %v1290, %v1289
  %v1292 = vmul.f32 0.5, %v1291
  %v1293 = vsub.f32 1.5, %v1292
  %v1294 = vmul.f32 %v1289, %v1293
  %vm1295 = vweird.f32 %v1236
  %vm1296 = vweird.f32 %v1289
  %vm1297 = vmor %vm1295, %vm1296
  %v1298 = vsel %vm1297, %v1289, %v1294
  %v1299 = vrsqrt.pop %v1237
  %v1300 = vmul.f32 %v1299, %v1237
  %v1301 = vmul.f32 %v1300, %v1299
  %v1302 = vmul.f32 0.5, %v1301
  %v1303 = vsub.f32 1.5, %v1302
  %v1304 = vmul.f32 %v1299, %v1303
  %vm1305 = vweird.f32 %v1237
  %vm1306 = vweird.f32 %v1299
  %vm1307 = vmor %vm1305, %vm1306
  %v1308 = vsel %vm1307, %v1299, %v1304
  %v1309 = vrsqrt.pop %v1238
  %v1310 = vmul.f32 %v1309, %v1238
  %v1311 = vmul.f32 %v1310, %v1309
  %v1312 = vmul.f32 0.5, %v1311
  %v1313 = vsub.f32 1.5, %v1312
  %v1314 = vmul.f32 %v1309, %v1313
  %vm1315 = vweird.f32 %v1238
  %vm1316 = vweird.f32 %v1309
  %vm1317 = vmor %vm1315, %vm1316
  %v1318 = vsel %vm1317, %v1309, %v1314
  %v1319 = vmul.f32 %v600, %v1248
  %v1320 = vmul.f32 %v603, %v1258
  %v1321 = vmul.f32 %v606, %v1268
  %v1322 = vmul.f32 %v609, %v1278
  %v1323 = vmul.f32 %v612, %v1288
  %v1324 = vmul.f32 %v615, %v1298
  %v1325 = vmul.f32 %v618, %v1308
  %v1326 = vmul.f32 %v621, %v1318
  %v1327 = vmul.f32 %v1319, %v1168
  %v1328 = vmul.f32 %v1320, %v1171
  %v1329 = vmul.f32 %v1321, %v1174
  %v1330 = vmul.f32 %v1322, %v1177
  %v1331 = vmul.f32 %v1323, %v1180
  %v1332 = vmul.f32 %v1324, %v1183
  %v1333 = vmul.f32 %v1325, %v1186
  %v1334 = vmul.f32 %v1326, %v1189
  %v1335 = vsub.f32 %v576, %v1327
  %v1336 = vsub.f32 %v579, %v1328
  %v1337 = vsub.f32 %v582, %v1329
  %v1338 = vsub.f32 %v585, %v1330
  %v1339 = vsub.f32 %v588, %v1331
  %v1340 = vsub.f32 %v591, %v1332
  %v1341 = vsub.f32 %v594, %v1333
  %v1342 = vsub.f32 %v597, %v1334
  %v1344 = vsel %vm910, %v1319, 0
  %v1347 = vsel %vm910, %v1320, 0
  %v1350 = vsel %vm910, %v1321, 0
  %v1353 = vsel %vm910, %v1322, 0
  %v1356 = vsel %vm910, %v1323, 0
  %v1359 = vsel %vm910, %v1324, 0
  %v1362 = vsel %vm910, %v1325, 0
  %v1365 = vsel %vm910, %v1326, 0
  %v1368 = vsel %vm910, %v1335, 0
  %v1371 = vsel %vm910, %v1336, 0
  %v1374 = vsel %vm910, %v1337, 0
  %v1377 = vsel %vm910, %v1338, 0
  %v1380 = vsel %vm910, %v1339, 0
  %v1383 = vsel %vm910, %v1340, 0
  %v1386 = vsel %vm910, %v1341, 0
  %v1389 = vsel %vm910, %v1342, 0
  %1391 = vmatpush.msra.mxu0 0.0
  %1392 = vmatpush.msra.mxu0 0.0
  %1393 = vmatpush.msra.mxu0 0.0
  %1394 = vmatpush.msra.mxu0 0.0
  %1395 = vmatpush.msra.mxu0 0.0
  %1396 = vmatpush.msra.mxu0 0.0
  %1397 = vmatpush.msra.mxu0 0.0
  %1398 = vmatpush.msra.mxu0 0.0
  %1399 = vmatpush.msra.mxu0 0.0
  %1400 = vmatpush.msra.mxu0 0.0
  %1401 = vmatpush.msra.mxu0 0.0
  %1402 = vmatpush.msra.mxu0 0.0
  %1403 = vmatpush.msra.mxu0 0.0
  %1404 = vmatpush.msra.mxu0 0.0
  %1405 = vmatpush.msra.mxu0 0.0
  %1406 = vmatpush.msra.mxu0 %v961
  %1407 = vmatmul.f32.gmra.mxu0 %v1344
  %v1408 = vpop.f32.mrf.mxu0
  %v1409 = vadd.f32 0.0, %v1408
  %1410 = vmatmul.f32.gmra.mxu0 %v1347
  %v1411 = vpop.f32.mrf.mxu0
  %v1412 = vadd.f32 0.0, %v1411
  %1413 = vmatmul.f32.gmra.mxu0 %v1350
  %v1414 = vpop.f32.mrf.mxu0
  %v1415 = vadd.f32 0.0, %v1414
  %1416 = vmatmul.f32.gmra.mxu0 %v1353
  %v1417 = vpop.f32.mrf.mxu0
  %v1418 = vadd.f32 0.0, %v1417
  %1419 = vmatmul.f32.gmra.mxu0 %v1356
  %v1420 = vpop.f32.mrf.mxu0
  %v1421 = vadd.f32 0.0, %v1420
  %1422 = vmatmul.f32.gmra.mxu0 %v1359
  %v1423 = vpop.f32.mrf.mxu0
  %v1424 = vadd.f32 0.0, %v1423
  %1425 = vmatmul.f32.gmra.mxu0 %v1362
  %v1426 = vpop.f32.mrf.mxu0
  %v1427 = vadd.f32 0.0, %v1426
  %1428 = vmatmul.f32.gmra.mxu0 %v1365
  %v1429 = vpop.f32.mrf.mxu0
  %v1430 = vadd.f32 0.0, %v1429
  %1431 = vmatmul.f32.gmra.mxu0 %v1368
  %v1432 = vpop.f32.mrf.mxu0
  %v1433 = vadd.f32 0.0, %v1432
  %1434 = vmatmul.f32.gmra.mxu0 %v1371
  %v1435 = vpop.f32.mrf.mxu0
  %v1436 = vadd.f32 0.0, %v1435
  %1437 = vmatmul.f32.gmra.mxu0 %v1374
  %v1438 = vpop.f32.mrf.mxu0
  %v1439 = vadd.f32 0.0, %v1438
  %1440 = vmatmul.f32.gmra.mxu0 %v1377
  %v1441 = vpop.f32.mrf.mxu0
  %v1442 = vadd.f32 0.0, %v1441
  %1443 = vmatmul.f32.gmra.mxu0 %v1380
  %v1444 = vpop.f32.mrf.mxu0
  %v1445 = vadd.f32 0.0, %v1444
  %1446 = vmatmul.f32.gmra.mxu0 %v1383
  %v1447 = vpop.f32.mrf.mxu0
  %v1448 = vadd.f32 0.0, %v1447
  %1449 = vmatmul.f32.gmra.mxu0 %v1386
  %v1450 = vpop.f32.mrf.mxu0
  %v1451 = vadd.f32 0.0, %v1450
  %1452 = vmatmul.f32.gmra.mxu0 %v1389
  %v1453 = vpop.f32.mrf.mxu0
  %v1454 = vadd.f32 0.0, %v1453
  %1455 = vdwg.mxu0
  %v1456 = vmul.f32 %v1409, %v1119
  %v1457 = vmul.f32 %v1412, %v1122
  %v1458 = vmul.f32 %v1415, %v1125
  %v1459 = vmul.f32 %v1418, %v1128
  %v1460 = vmul.f32 %v1421, %v1131
  %v1461 = vmul.f32 %v1424, %v1134
  %v1462 = vmul.f32 %v1427, %v1137
  %v1463 = vmul.f32 %v1430, %v1140
  %v1464 = vadd.f32 %v1456, %v1433
  %v1465 = vadd.f32 %v1457, %v1436
  %v1466 = vadd.f32 %v1458, %v1439
  %v1467 = vadd.f32 %v1459, %v1442
  %v1468 = vadd.f32 %v1460, %v1445
  %v1469 = vadd.f32 %v1461, %v1448
  %v1470 = vadd.f32 %v1462, %v1451
  %v1471 = vadd.f32 %v1463, %v1454
  %vm1472 = vcmp.gt.f32.partialorder %v1464, 0.0
  %vm1473 = vcmp.gt.f32.partialorder %v1465, 0.0
  %vm1474 = vcmp.gt.f32.partialorder %v1466, 0.0
  %vm1475 = vcmp.gt.f32.partialorder %v1467, 0.0
  %vm1476 = vcmp.gt.f32.partialorder %v1468, 0.0
  %vm1477 = vcmp.gt.f32.partialorder %v1469, 0.0
  %vm1478 = vcmp.gt.f32.partialorder %v1470, 0.0
  %vm1479 = vcmp.gt.f32.partialorder %v1471, 0.0
  %v1480 = vmul.f32 %v1464, 0.2
  %v1481 = vmul.f32 %v1465, 0.2
  %v1482 = vmul.f32 %v1466, 0.2
  %v1483 = vmul.f32 %v1467, 0.2
  %v1484 = vmul.f32 %v1468, 0.2
  %v1485 = vmul.f32 %v1469, 0.2
  %v1486 = vmul.f32 %v1470, 0.2
  %v1487 = vmul.f32 %v1471, 0.2
  %v1488 = vsel %vm1472, %v1464, %v1480
  %v1489 = vsel %vm1473, %v1465, %v1481
  %v1490 = vsel %vm1474, %v1466, %v1482
  %v1491 = vsel %vm1475, %v1467, %v1483
  %v1492 = vsel %vm1476, %v1468, %v1484
  %v1493 = vsel %vm1477, %v1469, %v1485
  %v1494 = vsel %vm1478, %v1470, %v1486
  %v1495 = vsel %vm1479, %v1471, %v1487
  %v1496 = vld [vmem:[%s4 + $0x80] sm:$0xff]
  %v1497 = vld [vmem:[%s4 + $0x88] sm:$0xff]
  %v1498 = vld [vmem:[%s4 + $0x90] sm:$0xff]
  %v1499 = vld [vmem:[%s4 + $0x98] sm:$0xff]
  %v1500 = vld [vmem:[%s4 + $0xa0] sm:$0xff]
  %v1501 = vld [vmem:[%s4 + $0xa8] sm:$0xff]
  %v1502 = vld [vmem:[%s4 + $0xb0] sm:$0xff]
  %v1503 = vld [vmem:[%s4 + $0xb8] sm:$0x7f]
  %v1504 = vld [vmem:[%s5 + $0x140] sm:$0xff]
  %v1505 = vld [vmem:[%s5 + $0x148] sm:$0xff]
  %v1506 = vld [vmem:[%s5 + $0x150] sm:$0xff]
  %v1507 = vld [vmem:[%s5 + $0x158] sm:$0xff]
  %v1508 = vld [vmem:[%s5 + $0x160] sm:$0xff]
  %v1509 = vld [vmem:[%s5 + $0x168] sm:$0xff]
  %v1510 = vld [vmem:[%s5 + $0x170] sm:$0xff]
  %v1511 = vld [vmem:[%s5 + $0x178] sm:$0x7f]
  %1513 = vset.pattern.permute.xlu0 0
  %1514 = vperm.xlu0 %1513, %v1504
  %v1515 = vpop.permute.xlu0 %1514
  %1518 = vset.pattern.permute.xlu0 0
  %1519 = vperm.xlu0 %1518, %v1505
  %v1520 = vpop.permute.xlu0 %1519
  %1523 = vset.pattern.permute.xlu0 0
  %1524 = vperm.xlu0 %1523, %v1506
  %v1525 = vpop.permute.xlu0 %1524
  %1528 = vset.pattern.permute.xlu0 0
  %1529 = vperm.xlu0 %1528, %v1507
  %v1530 = vpop.permute.xlu0 %1529
  %1533 = vset.pattern.permute.xlu0 0
  %1534 = vperm.xlu0 %1533, %v1508
  %v1535 = vpop.permute.xlu0 %1534
  %1538 = vset.pattern.permute.xlu0 0
  %1539 = vperm.xlu0 %1538, %v1509
  %v1540 = vpop.permute.xlu0 %1539
  %1543 = vset.pattern.permute.xlu0 0
  %1544 = vperm.xlu0 %1543, %v1510
  %v1545 = vpop.permute.xlu0 %1544
  %1548 = vset.pattern.permute.xlu0 0
  %1549 = vperm.xlu0 %1548, %v1511
  %v1550 = vpop.permute.xlu0 %1549
  %v1553 = vsel %vm1076, %v1496, 0
  %v1556 = vsel %vm1076, %v1497, 0
  %v1559 = vsel %vm1076, %v1498, 0
  %v1562 = vsel %vm1076, %v1499, 0
  %v1565 = vsel %vm1076, %v1500, 0
  %v1568 = vsel %vm1076, %v1501, 0
  %v1571 = vsel %vm1076, %v1502, 0
  %v1574 = vsel %vm1076, %v1503, 0
  %1576 = vmatpush.msra.mxu0 0.0
  %1577 = vmatpush.msra.mxu0 0.0
  %1578 = vmatpush.msra.mxu0 0.0
  %1579 = vmatpush.msra.mxu0 0.0
  %1580 = vmatpush.msra.mxu0 0.0
  %1581 = vmatpush.msra.mxu0 0.0
  %1582 = vmatpush.msra.mxu0 0.0
  %1583 = vmatpush.msra.mxu0 0.0
  %1584 = vmatpush.msra.mxu0 %v1495
  %1585 = vmatpush.msra.mxu0 %v1494
  %1586 = vmatpush.msra.mxu0 %v1493
  %1587 = vmatpush.msra.mxu0 %v1492
  %1588 = vmatpush.msra.mxu0 %v1491
  %1589 = vmatpush.msra.mxu0 %v1490
  %1590 = vmatpush.msra.mxu0 %v1489
  %1591 = vmatpush.msra.mxu0 %v1488
  %1592 = vmatmul.f32.gmra.mxu0 %v1553
  %v1593 = vpop.f32.mrf.mxu0
  %v1594 = vadd.f32 %v1515, %v1593
  %1595 = vmatmul.f32.gmra.mxu0 %v1556
  %v1596 = vpop.f32.mrf.mxu0
  %v1597 = vadd.f32 %v1520, %v1596
  %1598 = vmatmul.f32.gmra.mxu0 %v1559
  %v1599 = vpop.f32.mrf.mxu0
  %v1600 = vadd.f32 %v1525, %v1599
  %1601 = vmatmul.f32.gmra.mxu0 %v1562
  %v1602 = vpop.f32.mrf.mxu0
  %v1603 = vadd.f32 %v1530, %v1602
  %1604 = vmatmul.f32.gmra.mxu0 %v1565
  %v1605 = vpop.f32.mrf.mxu0
  %v1606 = vadd.f32 %v1535, %v1605
  %1607 = vmatmul.f32.gmra.mxu0 %v1568
  %v1608 = vpop.f32.mrf.mxu0
  %v1609 = vadd.f32 %v1540, %v1608
  %1610 = vmatmul.f32.gmra.mxu0 %v1571
  %v1611 = vpop.f32.mrf.mxu0
  %v1612 = vadd.f32 %v1545, %v1611
  %1613 = vmatmul.f32.gmra.mxu0 %v1574
  %v1614 = vpop.f32.mrf.mxu0
  %v1615 = vadd.f32 %v1550, %v1614
  %1616 = vdwg.mxu0
  %1617 = vst [vmem:[%s6] sm:$0xff] %v1594
  %1618 = vst [vmem:[%s6 + $0x8] sm:$0xff] %v1597
  %1619 = vst [vmem:[%s6 + $0x10] sm:$0xff] %v1600
  %1620 = vst [vmem:[%s6 + $0x18] sm:$0xff] %v1603
  %1621 = vst [vmem:[%s6 + $0x20] sm:$0xff] %v1606
  %1622 = vst [vmem:[%s6 + $0x28] sm:$0xff] %v1609
  %1623 = vst [vmem:[%s6 + $0x30] sm:$0xff] %v1612
  %1624 = vst [vmem:[%s6 + $0x38] sm:$0x7f] %v1615
  // Predicated region
  $region26: #{decode.1} parent=0 // pred_check
    _
  $region27: #{decode.1} parent=0 // pred_check_branch
    %1626 = sbr.rel (0) target = $region29
  $region28: #{decode.1} parent=0 // pred_region
    _
  $region29: #{decode.1} parent=0 // pred_fallthru
    _
  // Predicated region
  $region30: #{decode.1} parent=0 // pred_check
    _
  $region31: #{decode.1} parent=0 // pred_check_branch
    %1628 = sbr.rel (0) target = $region33
  $region32: #{decode.1} parent=0 // pred_region
    _
  $region33: #{decode.1} parent=0 // pred_fallthru
    _

</llo_original>
